<compile_context>
chip_gen: v7x
topology: tpu7x:2x2x1
jax: 0.10.0
libtpu: 0.0.40
codegen_flags: <defaults>
</compile_context>

<pallas_src>
import jax
import jax.numpy as jnp
from jax.experimental import pallas as pl
from jax.experimental.pallas import tpu as pltpu


# ----------------------------------------------------------------------------- helpers
def _round_up(x, m):
    return ((x + m - 1) // m) * m


def _vmem_capacity_bytes():
    """Physical VMEM per TensorCore (generation-aware), with a safe fallback."""
    try:
        info = pltpu.get_tpu_info()
        cap = int(getattr(info, "vmem_capacity_bytes", 0))
        if cap > 0:
            return cap
    except Exception:
        pass
    return 64 * 1024 * 1024  # conservative: v7x per-core VMEM


def _largest_tile(dim_pad, cap):
    """Largest multiple of 128 that divides dim_pad (itself a 128-multiple) and <= cap."""
    cap = max(128, min(cap, dim_pad))
    t = (cap // 128) * 128
    while dim_pad % t != 0:
        t -= 128
    return t


def _ws_bytes(tm, tn, tk, a_b, b_b, o_b, use_scratch):
    """Double-buffered VMEM working-set estimate for one grid step."""
    ws = 2 * (tm * tk * a_b + tk * tn * b_b + tm * tn * o_b + tn * 4)
    if use_scratch:
        ws += tm * tn * 4
    return ws


def _select_tiles(M, N, K, a_b, b_b, o_b, use_scratch, budget,
                  tm_cap, tn_cap, tk_cap, min_i_blocks=2):
    # tn = full (padded) output width whenever it fits: the A stream (adjacency)
    # is then read from HBM exactly once instead of f_out_p / tn times.
    tn = _largest_tile(N, tn_cap)
    # Keep >= min_i_blocks blocks on the i axis so both v7x TensorCores get work.
    tm_cap_eff = tm_cap
    if min_i_blocks > 1 and M >= min_i_blocks * 128:
        tm_cap_eff = min(tm_cap, M // min_i_blocks)
    tm = _largest_tile(M, tm_cap_eff)
    tk = _largest_tile(K, tk_cap)
    # Shrink (largest of tm/tk first, tn last) until the working set fits VMEM budget.
    while _ws_bytes(tm, tn, tk, a_b, b_b, o_b, use_scratch) > budget:
        if tk >= tm and tk > 128:
            tk = _largest_tile(K, tk - 128)
        elif tm > 128:
            tm = _largest_tile(M, tm - 128)
        elif tn > 128:
            tn = _largest_tile(N, tn - 128)
        else:
            break
    return tm, tn, tk


def _dot_f32(a_ref, b_ref):
    """MXU dot of the current A/B tiles with f32 accumulation.

    A is cast to B's dtype on the fly (lets f32 adjacency stream straight from HBM
    while the MXU runs at the bf16 rate). For a genuine f32 compute path we request
    HIGHEST precision so the escape hatch really is full f32.
    """
    a = a_ref[...].astype(b_ref.dtype)
    prec = (jax.lax.Precision.HIGHEST
            if jnp.dtype(b_ref.dtype) == jnp.dtype(jnp.float32) else None)
    return jnp.dot(a, b_ref[...], preferred_element_type=jnp.float32, precision=prec)


# ----------------------------------------------------------------------------- kernels
def _mm_bias_outacc_kernel(a_ref, b_ref, bias_ref, o_ref):
    """C = A @ B + bias, accumulated directly in the resident (f32) output block."""
    k = pl.program_id(2)

    @pl.when(k == 0)
    def _():
        o_ref[...] = jnp.zeros_like(o_ref)

    o_ref[...] += _dot_f32(a_ref, b_ref)

    @pl.when(k == pl.num_programs(2) - 1)
    def _():
        o_ref[...] += bias_ref[...].astype(o_ref.dtype)


def _mm_bias_scratch_kernel(a_ref, b_ref, bias_ref, o_ref, acc_ref):
    """C = A @ B + bias with an f32 VMEM scratch accumulator (non-f32 output dtype)."""
    k = pl.program_id(2)

    @pl.when(k == 0)
    def _():
        acc_ref[...] = jnp.zeros_like(acc_ref)

    acc_ref[...] += _dot_f32(a_ref, b_ref)

    @pl.when(k == pl.num_programs(2) - 1)
    def _():
        o_ref[...] = (acc_ref[...] + bias_ref[...]).astype(o_ref.dtype)


def _tiled_matmul(a, b, bias_row, out_dtype, *, budget, vmem_limit,
                  tm_cap, tn_cap, tk_cap, min_i_blocks=2):
    """C = A @ B + bias_row. All dims must already be multiples of 128."""
    M, K = a.shape
    K2, N = b.shape
    assert K == K2 and bias_row.shape == (1, N)

    a_b = jnp.dtype(a.dtype).itemsize
    b_b = jnp.dtype(b.dtype).itemsize
    o_b = jnp.dtype(out_dtype).itemsize
    # f32 outputs accumulate in place (output-resident across k); narrower output
    # dtypes need a separate f32 scratch accumulator.
    use_scratch = jnp.dtype(out_dtype) != jnp.dtype(jnp.float32)

    tm, tn, tk = _select_tiles(M, N, K, a_b, b_b, o_b, use_scratch, budget,
                               tm_cap, tn_cap, tk_cap, min_i_blocks)
    grid = (M // tm, N // tn, K // tk)

    kernel = _mm_bias_scratch_kernel if use_scratch else _mm_bias_outacc_kernel
    scratch = [pltpu.VMEM((tm, tn), jnp.float32)] if use_scratch else []

    return pl.pallas_call(
        kernel,
        out_shape=jax.ShapeDtypeStruct((M, N), out_dtype),
        grid_spec=pltpu.PrefetchScalarGridSpec(
            num_scalar_prefetch=0,
            grid=grid,
            in_specs=[
                pl.BlockSpec((tm, tk), lambda i, j, k: (i, k)),
                pl.BlockSpec((tk, tn), lambda i, j, k: (k, j)),
                pl.BlockSpec((1, tn), lambda i, j, k: (0, j)),
            ],
            out_specs=pl.BlockSpec((tm, tn), lambda i, j, k: (i, j)),
            scratch_shapes=scratch,
        ),
        compiler_params=pltpu.CompilerParams(
            dimension_semantics=("parallel", "parallel", "arbitrary"),
            vmem_limit_bytes=vmem_limit,
        ),
    )(a, b, bias_row)


# ----------------------------------------------------------------------------- wrapper
def graph_convolution(inputs, adj, weight, bias=None, global_W=None,
                      compute_dtype=jnp.bfloat16, tile_cap=None):
    """Pallas GCN layer forward.

    inputs:   [N, F_in]  float32
    adj:      [N, N]     float32 (dense adjacency; torch sparse adj densified)
    weight:   [F_in, F_out]
    bias:     [F_out] or None
    global_W: [F_out, F_out2] or None
    returns:  [N, F_out(2)] float32

    compute_dtype=bf16 halves the HBM traffic of the dominant adjacency stream
    (f32 MXU accumulation keeps the error bounded); pass jnp.float32 for a
    full-precision path matching the PyTorch f32 reference.
    """
    N, f_in = inputs.shape

    # Fold global_W into the weight: (X@W)@GW == X@(W@GW) up to f32 rounding,
    # and W@GW is F_in x F_out x F_out2 flops instead of N-scale work.
    if global_W is not None:
        weight = jnp.dot(weight.astype(jnp.float32), global_W.astype(jnp.float32),
                         preferred_element_type=jnp.float32,
                         precision=jax.lax.Precision.HIGHEST)
    f_out = weight.shape[1]

    # TODO(synk): torch checks `len(adj._values()) == 0` (sparse nnz) and
    # short-circuits to an all-zero (bias-free) output; that data-dependent early
    # exit has no equivalent for a dense adjacency and is not reproduced here.

    # Small-graph fallback: padding copies + a (1,1,1)-grid pallas_call launch cost
    # far more than the fused XLA matmuls they would replace.
    if N <= 128 and f_in <= 256 and f_out <= 256:
        hp = jax.lax.Precision.HIGHEST
        support = jnp.dot(inputs.astype(jnp.float32), weight.astype(jnp.float32),
                          preferred_element_type=jnp.float32, precision=hp)
        out = jnp.dot(adj.astype(jnp.float32), support,
                      preferred_element_type=jnp.float32, precision=hp)
        if bias is not None:
            out = out + bias.astype(jnp.float32)
        return out

    cd = jnp.dtype(compute_dtype)
    N_p = _round_up(N, 128)
    f_in_p = _round_up(f_in, 128)
    f_out_p = _round_up(f_out, 128)

    # Pad only when a dim is not 128-aligned. Zero padding is exact (padded rows /
    # cols contribute 0 to every dot product). The dominant [N, N] adjacency is
    # passed straight through (no HBM copy / wrapper cast) when N is aligned; the
    # kernel casts A tiles to the compute dtype on the fly.
    if N == N_p:
        adj_in = adj
    else:
        adj_in = jnp.zeros((N_p, N_p), cd).at[:N, :N].set(adj.astype(cd))

    if (N, f_in) == (N_p, f_in_p):
        x_in = inputs
    else:
        x_in = jnp.zeros((N_p, f_in_p), cd).at[:N, :f_in].set(inputs.astype(cd))

    if (f_in, f_out) == (f_in_p, f_out_p):
        w_in = weight.astype(cd)
    else:
        w_in = jnp.zeros((f_in_p, f_out_p), cd).at[:f_in, :f_out].set(weight.astype(cd))

    if bias is None:
        b_row = jnp.zeros((1, f_out_p), jnp.float32)
    else:
        b_row = jnp.zeros((1, f_out_p), jnp.float32).at[0, :f_out].set(
            bias.astype(jnp.float32))
    zero_bias = jnp.zeros((1, f_out_p), jnp.float32)

    # Generation-aware VMEM budgeting (v7x: 64 MiB/TC; v5e/v6e: 128 MiB).
    vmem_cap = _vmem_capacity_bytes()
    budget = int(vmem_cap * 0.65)
    vmem_limit = int(vmem_cap * 0.75)

    if tile_cap is None:
        tm_cap1 = tk_cap1 = 4096   # stage 1 is skinny: huge row blocks, tiny k/n DMAs
        tm_cap2 = tk_cap2 = 2048   # stage 2: big adjacency tiles to hide per-step overhead
    else:
        tm_cap1 = tk_cap1 = tm_cap2 = tk_cap2 = int(tile_cap)

    # Stage 1: support = X @ W' (kept in compute dtype to halve stage-2 B traffic).
    support = _tiled_matmul(x_in, w_in, zero_bias, cd,
                            budget=budget, vmem_limit=vmem_limit,
                            tm_cap=tm_cap1, tn_cap=f_out_p, tk_cap=tk_cap1)
    # Stage 2: out = A @ support + bias (k-reduction over N_p; f32 output block is
    # the accumulator, no VMEM scratch).
    out_p = _tiled_matmul(adj_in, support, b_row, jnp.float32,
                          budget=budget, vmem_limit=vmem_limit,
                          tm_cap=tm_cap2, tn_cap=f_out_p, tk_cap=tk_cap2)

    return out_p[:N, :f_out]


# ----------------------------------------------------------------------------- test
def _reference(inputs, adj, weight, bias, global_W=None):
    hp = jax.lax.Precision.HIGHEST
    support = jnp.dot(inputs, weight, precision=hp)
    if global_W is not None:
        support = jnp.dot(support, global_W, precision=hp)
    out = jnp.dot(adj, support, precision=hp)
    return out + bias


if __name__ == "__main__":
    key = jax.random.PRNGKey(0)
    k_x, k_adj, k_w, k_b, k_gw = jax.random.split(key, 5)

    # Small but Pallas-exercising sizes: N is 128-aligned so the adjacency passes
    # through without a padded copy; f_in=200 forces feature-dim padding.
    N = 256
    in_features = 200
    out_features = 32

    # Deterministic init mirroring reset_parameters(): stdv = 1/sqrt(out_features).
    stdv = 1.0 / (out_features ** 0.5)
    weight = jax.random.uniform(k_w, (in_features, out_features), jnp.float32,
                                minval=-stdv, maxval=stdv)
    bias = jax.random.uniform(k_b, (out_features,), jnp.float32,
                              minval=-stdv, maxval=stdv)
    global_W = jax.random.uniform(k_gw, (out_features, out_features), jnp.float32,
                                  minval=-stdv, maxval=stdv)

    inputs = jax.random.normal(k_x, (N, in_features), jnp.float32)
    # dense adjacency (row-normalized random graph)
    adj_raw = (jax.random.uniform(k_adj, (N, N)) > 0.5).astype(jnp.float32)
    adj = adj_raw / jnp.maximum(adj_raw.sum(axis=1, keepdims=True), 1.0)

    ref = _reference(inputs, adj, weight, bias)

    # 1) f32 compute path vs pure-JAX HIGHEST-precision reference (tight tolerance).
    out_f32 = jax.block_until_ready(
        graph_convolution(inputs, adj, weight, bias, compute_dtype=jnp.float32))
    assert out_f32.shape == (N, out_features)
    rel_f32 = jnp.linalg.norm(out_f32 - ref) / jnp.linalg.norm(ref)
    assert rel_f32 < 1e-3, f"f32 mismatch (rel={rel_f32})"

    # 2) default bf16 compute path (relaxed, relative-error check for the cast).
    out_bf16 = jax.block_until_ready(graph_convolution(inputs, adj, weight, bias))
    assert out_bf16.shape == (N, out_features)
    rel_bf16 = jnp.linalg.norm(out_bf16 - ref) / jnp.linalg.norm(ref)
    assert rel_bf16 < 2e-2, f"bf16 mismatch (rel={rel_bf16})"

    # 3) global_W branch (folded weight, f32 compute; reassociation-level diff only).
    ref_gw = _reference(inputs, adj, weight, bias, global_W=global_W)
    out_gw = jax.block_until_ready(
        graph_convolution(inputs, adj, weight, bias, global_W=global_W,
                          compute_dtype=jnp.float32))
    assert out_gw.shape == (N, out_features)
    rel_gw = jnp.linalg.norm(out_gw - ref_gw) / jnp.linalg.norm(ref_gw)
    assert rel_gw < 1e-3, f"global_W mismatch (rel={rel_gw})"

    # 4) force multi-step k reduction (exercises both accumulation variants).
    out_kf32 = jax.block_until_ready(
        graph_convolution(inputs, adj, weight, bias,
                          compute_dtype=jnp.float32, tile_cap=128))
    rel_kf32 = jnp.linalg.norm(out_kf32 - ref) / jnp.linalg.norm(ref)
    assert rel_kf32 < 1e-3, f"f32 k-loop mismatch (rel={rel_kf32})"

    out_kbf16 = jax.block_until_ready(
        graph_convolution(inputs, adj, weight, bias, tile_cap=128))
    rel_kbf16 = jnp.linalg.norm(out_kbf16 - ref) / jnp.linalg.norm(ref)
    assert rel_kbf16 < 2e-2, f"bf16 k-loop mismatch (rel={rel_kbf16})"

    # 5) tiny-graph fallback path (non-Pallas; avoids padding/launch overhead).
    n_small = 8
    x_s, adj_s = inputs[:n_small], adj[:n_small, :n_small]
    ref_s = _reference(x_s, adj_s, weight, bias)
    out_s = jax.block_until_ready(graph_convolution(x_s, adj_s, weight, bias))
    assert out_s.shape == (n_small, out_features)
    assert jnp.allclose(out_s, ref_s, atol=1e-4, rtol=1e-4), "small-graph fallback mismatch"

    print("KERNEL_OK")
</pallas_src>

<mosaic_0001>
module attributes {stable_mosaic.version = 11 : i64} {
  func.func @_mm_bias_outacc_kernel(%arg0: i32, %arg1: i32, %arg2: i32, %arg3: memref<128x256xf32, #tpu.memory_space<vmem>>, %arg4: memref<256x128xf32, #tpu.memory_space<vmem>>, %arg5: memref<1x128xf32, #tpu.memory_space<vmem>>, %arg6: memref<128x128xf32, #tpu.memory_space<vmem>>) attributes {dimension_semantics = [#tpu.dimension_semantics<parallel>, #tpu.dimension_semantics<parallel>, #tpu.dimension_semantics<arbitrary>], iteration_bounds = array<i64: 2, 1, 1>, scalar_prefetch = 0 : i64, scratch_operands = 0 : i64, tpu.core_type = #tpu.core_type<tc>, window_params = [{transform_indices = @transform_0, window_bounds = array<i64: 128, 256>}, {transform_indices = @transform_1, window_bounds = array<i64: 256, 128>}, {transform_indices = @transform_2, window_bounds = array<i64: 1, 128>}, {transform_indices = @transform_3, window_bounds = array<i64: 128, 128>}]} {
    %c0_i32 = arith.constant 0 : i32
    %0 = arith.cmpi eq, %arg2, %c0_i32 : i32
    %1 = arith.extui %0 : i1 to i32
    %c0_i32_0 = arith.constant 0 : i32
    %2 = arith.cmpi ne, %1, %c0_i32_0 : i32
    scf.if %2 {
      %cst_10 = arith.constant 0.000000e+00 : f32
      %12 = vector.broadcast %cst_10 : f32 to vector<128x128xf32>
      %c0_11 = arith.constant 0 : index
      %c0_12 = arith.constant 0 : index
      %13 = vector.load %arg6[%c0_11, %c0_12] : memref<128x128xf32, #tpu.memory_space<vmem>>, vector<128x128xf32>
      tpu.vector_store %arg6[%c0_11, %c0_12], %12 {strides = array<i32>} : memref<128x128xf32, #tpu.memory_space<vmem>>, vector<128x128xf32>,
    } else {
    }
    %c0 = arith.constant 0 : index
    %c0_1 = arith.constant 0 : index
    %3 = vector.load %arg6[%c0, %c0_1] : memref<128x128xf32, #tpu.memory_space<vmem>>, vector<128x128xf32>
    %c0_2 = arith.constant 0 : index
    %c0_3 = arith.constant 0 : index
    %4 = vector.load %arg3[%c0_2, %c0_3] : memref<128x256xf32, #tpu.memory_space<vmem>>, vector<128x256xf32>
    %c0_4 = arith.constant 0 : index
    %c0_5 = arith.constant 0 : index
    %5 = vector.load %arg4[%c0_4, %c0_5] : memref<256x128xf32, #tpu.memory_space<vmem>>, vector<256x128xf32>
    %cst = arith.constant dense<0.000000e+00> : vector<128x128xf32>
    %6 = tpu.matmul %4, %5, %cst {dimension_numbers = #tpu.dot_dimension_numbers<[1], [0], [0], [1], [0, 0, 1, 1], [], []>, precision = #tpu.contract_precision<fp32>} : vector<128x256xf32>, vector<256x128xf32>, vector<128x128xf32> -> vector<128x128xf32>
    %7 = arith.addf %3, %6 : vector<128x128xf32>
    %c0_6 = arith.constant 0 : index
    %c0_7 = arith.constant 0 : index
    %8 = vector.load %arg6[%c0_6, %c0_7] : memref<128x128xf32, #tpu.memory_space<vmem>>, vector<128x128xf32>
    tpu.vector_store %arg6[%c0_6, %c0_7], %7 {strides = array<i32>} : memref<128x128xf32, #tpu.memory_space<vmem>>, vector<128x128xf32>,
    %c0_i32_8 = arith.constant 0 : i32
    %9 = arith.cmpi eq, %arg2, %c0_i32_8 : i32
    %10 = arith.extui %9 : i1 to i32
    %c0_i32_9 = arith.constant 0 : i32
    %11 = arith.cmpi ne, %10, %c0_i32_9 : i32
    scf.if %11 {
      %c0_10 = arith.constant 0 : index
      %c0_11 = arith.constant 0 : index
      %12 = vector.load %arg6[%c0_10, %c0_11] : memref<128x128xf32, #tpu.memory_space<vmem>>, vector<128x128xf32>
      %c0_12 = arith.constant 0 : index
      %c0_13 = arith.constant 0 : index
      %13 = vector.load %arg5[%c0_12, %c0_13] : memref<1x128xf32, #tpu.memory_space<vmem>>, vector<1x128xf32>
      %14 = vector.broadcast %13 : vector<1x128xf32> to vector<128x128xf32>
      %15 = arith.addf %12, %14 : vector<128x128xf32>
      %c0_14 = arith.constant 0 : index
      %c0_15 = arith.constant 0 : index
      %16 = vector.load %arg6[%c0_14, %c0_15] : memref<128x128xf32, #tpu.memory_space<vmem>>, vector<128x128xf32>
      tpu.vector_store %arg6[%c0_14, %c0_15], %15 {strides = array<i32>} : memref<128x128xf32, #tpu.memory_space<vmem>>, vector<128x128xf32>,
    } else {
    }
    return
  }
  func.func @transform_0(%arg0: i32, %arg1: i32, %arg2: i32) -> (i32, i32) {
    %c0_i32 = arith.constant 0 : i32
    return %arg0, %arg2 : i32, i32
  }
  func.func @transform_1(%arg0: i32, %arg1: i32, %arg2: i32) -> (i32, i32) {
    %c0_i32 = arith.constant 0 : i32
    return %arg2, %arg1 : i32, i32
  }
  func.func @transform_2(%arg0: i32, %arg1: i32, %arg2: i32) -> (i32, i32) {
    %c0_i32 = arith.constant 0 : i32
    %c0_i32_0 = arith.constant 0 : i32
    return %c0_i32, %arg1 : i32, i32
  }
  func.func @transform_3(%arg0: i32, %arg1: i32, %arg2: i32) -> (i32, i32) {
    %c0_i32 = arith.constant 0 : i32
    return %arg0, %arg1 : i32, i32
  }
}

</mosaic_0001>

<llo_original>
// kernel: tpu_custom_call.1
$region0: #{tpu_custom_call.1}
  #allocation0 [shape = 'u32[]', space=smem, size = 0x4, offset = 0x4, fixed_abs, tag = 'smem constant byte address 0x4 - core index']
  #allocation1 [shape = 'u32[144,128]{1,0:T(1,128)}', space=vmem, size = 0x12000, scoped, tag = 'internal scratch']
  %s0 = inlined_call_operand.hbm [shape: f32[256,256], index: 0, kind: input, shape index: {}]
  %s1 = inlined_call_operand.hbm [shape: f32[256,128], index: 1, kind: input, shape index: {}]
  %s2 = inlined_call_operand.vmem [shape: f32[1,128], index: 2, kind: input, shape index: {}]
  %s3 = inlined_call_operand.hbm [shape: f32[256,128], index: 3, kind: output, shape index: {}]
  %s4 = sld [smem:[#allocation0]]
  $region61: #{tpu_custom_call.1} parent=0
    _
  %s6 = ssub.s32 1, %s4
  %s7 = scalar_select 0, %s6, %s4
  $region1: #{tpu_custom_call.1} parent=0
    #allocation2 [shape = 'u8[262144]{0}', space=vmem, size = 0x40000, scoped, tag = 'input window, operand 0']
    #allocation3 [shape = 's32[2]{0}', space=sflag, size = 0x8, scoped, tag = 'scoped memory for tpu_custom_call.1']
    #allocation4 [shape = 's32[2]{0}', space=sflag, size = 0x8, scoped, tag = 'scoped memory for tpu_custom_call.1']
    #allocation5 [shape = 'u8[131072]{0}', space=vmem, size = 0x20000, scoped, tag = 'input window, operand 1, single buffered']
    #allocation6 [shape = 's32[1]{0}', space=sflag, size = 0x4, scoped, tag = 'scoped memory for tpu_custom_call.1']
    #allocation7 [shape = 'u8[131072]{0}', space=vmem, size = 0x20000, scoped, tag = 'output window, operand 0']
    %8 = vsyncpa [#allocation3], 0
    %s9 = scalar_lea.sflag [#allocation3], 1
    %10 = vsyncpa %s9, 0
    %11 = vsyncpa [#allocation6], 0
    %12 = vsyncpa [#allocation4], 0
    %s13 = scalar_lea.sflag [#allocation4], 1
    %14 = vsyncpa %s13, 0
    loop: start=0, step=1, limit=4
    $region2: #{tpu_custom_call.1} parent=1 // loop_pre_header
      _
    $region3: #{tpu_custom_call.1} parent=1 // loop_header
      %s16 = sphi 0, %s20
      %p17 = scmp.ge.s32.totalorder %s16, 4
      %s23 = sphi 0, %s42
      %s24 = sphi 0, %s38
      %s25 = sphi 0, %s34
      %s26 = sphi 0, %s23
      %s27 = sphi 0, %s24
      %s28 = sphi 0, %s25
      %s29 = sphi 0, %s26
      %s30 = sphi 0, %s27
      %s31 = sphi 0, %s28
      %s47 = sphi 0, %s49
      %s50 = sphi 0, %s47
      %s51 = sphi 0, %s50
      %s67 = sphi 0, %s51
      %s75 = sphi 0, %s77
      %s78 = sphi 0, %s75
      %s79 = sphi 0, %s78
      %s95 = sphi 0, %s79
      %s101 = sphi 0, %s103
      %s104 = sphi 0, %s101
      %s105 = sphi 0, %s104
      %s121 = sphi 0, %s105
      %s129 = sphi 0, %s131
      %s132 = sphi 0, %s129
      %s133 = sphi 0, %s132
      %s149 = sphi 0, %s133
    $region4: #{tpu_custom_call.1} parent=1 // loop_header_branch
      %19 = sbr.rel (%p17) target = $region8
    $region5: #{tpu_custom_call.1} parent=1 // loop_body
      %s21 = ssub.s32 %s16, 1
      %s22 = ssub.s32 %s16, 2
      %s32 = sadd.s32 1, %s25
      %p33 = scmp.ge.s32.totalorder %s32, 1
      %s34 = scalar_select %p33, 0, %s32
      %s35 = sadd.s32 1, %s24
      %s36 = scalar_select %p33, %s35, %s24
      %p37 = scmp.ge.s32.totalorder %s36, 1
      %s38 = scalar_select %p37, 0, %s36
      %s39 = sadd.s32 1, %s23
      %s40 = scalar_select %p37, %s39, %s23
      %p41 = scmp.ge.s32.totalorder %s40, 2
      %s42 = scalar_select %p41, 0, %s40
      %s43 = ssub.s32 %s23, %s42
      %s44 = ssub.s32 %s25, %s34
      %s45 = sor.u32 %s43, %s44
      %p46 = scmp.eq.s32.totalorder %s45, 0
      %s48 = sadd.s32 %s47, 1
      %s49 = scalar_select %p46, %s47, %s48
      %p52 = pneg %p46
      %p53 = scmp.eq.s32.totalorder %s16, 1
      %p54 = por %p52, %p53
      %p55 = scmp.ne.s32.totalorder %s47, %s50
      %p56 = scmp.eq.s32.totalorder %s16, 0
      %p57 = por %p55, %p56
      %p58 = scmp.ne.s32.totalorder %s47, %s50
      %p59 = scmp.eq.s32.totalorder %s21, 1
      %p60 = por %p58, %p59
      %p61 = scmp.ne.s32.totalorder %s50, %s51
      %p62 = scmp.eq.s32.totalorder %s21, 0
      %p63 = por %p61, %p62
      %p64 = scmp.ne.s32.totalorder %s50, %s51
      %p65 = scmp.eq.s32.totalorder %s22, 1
      %p66 = por %p64, %p65
      %p68 = scmp.ne.s32.totalorder %s51, %s67
      %p69 = scmp.eq.s32.totalorder %s22, 0
      %p70 = por %p68, %p69
      %s71 = ssub.s32 %s25, %s34
      %s72 = ssub.s32 %s24, %s38
      %s73 = sor.u32 %s71, %s72
      %p74 = scmp.eq.s32.totalorder %s73, 0
      %s76 = sadd.s32 %s75, 1
      %s77 = scalar_select %p74, %s75, %s76
      %p80 = pneg %p74
      %p81 = scmp.eq.s32.totalorder %s16, 1
      %p82 = por %p80, %p81
      %p83 = scmp.ne.s32.totalorder %s75, %s78
      %p84 = scmp.eq.s32.totalorder %s16, 0
      %p85 = por %p83, %p84
      %p86 = scmp.ne.s32.totalorder %s75, %s78
      %p87 = scmp.eq.s32.totalorder %s21, 1
      %p88 = por %p86, %p87
      %p89 = scmp.ne.s32.totalorder %s78, %s79
      %p90 = scmp.eq.s32.totalorder %s21, 0
      %p91 = por %p89, %p90
      %p92 = scmp.ne.s32.totalorder %s78, %s79
      %p93 = scmp.eq.s32.totalorder %s22, 1
      %p94 = por %p92, %p93
      %p96 = scmp.ne.s32.totalorder %s79, %s95
      %p97 = scmp.eq.s32.totalorder %s22, 0
      %p98 = por %p96, %p97
      %s99 = ssub.s32 %s24, %s38
      %p100 = scmp.eq.s32.totalorder %s99, 0
      %s102 = sadd.s32 %s101, 1
      %s103 = scalar_select %p100, %s101, %s102
      %p106 = pneg %p100
      %p107 = scmp.eq.s32.totalorder %s16, 1
      %p108 = por %p106, %p107
      %p109 = scmp.ne.s32.totalorder %s101, %s104
      %p110 = scmp.eq.s32.totalorder %s16, 0
      %p111 = por %p109, %p110
      %p112 = scmp.ne.s32.totalorder %s101, %s104
      %p113 = scmp.eq.s32.totalorder %s21, 1
      %p114 = por %p112, %p113
      %p115 = scmp.ne.s32.totalorder %s104, %s105
      %p116 = scmp.eq.s32.totalorder %s21, 0
      %p117 = por %p115, %p116
      %p118 = scmp.ne.s32.totalorder %s104, %s105
      %p119 = scmp.eq.s32.totalorder %s22, 1
      %p120 = por %p118, %p119
      %p122 = scmp.ne.s32.totalorder %s105, %s121
      %p123 = scmp.eq.s32.totalorder %s22, 0
      %p124 = por %p122, %p123
      %s125 = ssub.s32 %s23, %s42
      %s126 = ssub.s32 %s24, %s38
      %s127 = sor.u32 %s125, %s126
      %p128 = scmp.eq.s32.totalorder %s127, 0
      %s130 = sadd.s32 %s129, 1
      %s131 = scalar_select %p128, %s129, %s130
      %p134 = pneg %p128
      %p135 = scmp.eq.s32.totalorder %s16, 1
      %p136 = por %p134, %p135
      %p137 = scmp.ne.s32.totalorder %s129, %s132
      %p138 = scmp.eq.s32.totalorder %s16, 0
      %p139 = por %p137, %p138
      %p140 = scmp.ne.s32.totalorder %s129, %s132
      %p141 = scmp.eq.s32.totalorder %s21, 1
      %p142 = por %p140, %p141
      %p143 = scmp.ne.s32.totalorder %s132, %s133
      %p144 = scmp.eq.s32.totalorder %s21, 0
      %p145 = por %p143, %p144
      %p146 = scmp.ne.s32.totalorder %s132, %s133
      %p147 = scmp.eq.s32.totalorder %s22, 1
      %p148 = por %p146, %p147
      %p150 = scmp.ne.s32.totalorder %s133, %s149
      %p151 = scmp.eq.s32.totalorder %s22, 0
      %p152 = por %p150, %p151
      %p153 = scmp.le.s32.totalorder 1, %s16
      %p154 = scmp.lt.s32.totalorder %s16, 3
      %p155 = pnand %p153, %p154
      %p156 = pneg %p155
      // Predicated region
      $region9: #{tpu_custom_call.1} parent=5 // pred_check
        _
      $region10: #{tpu_custom_call.1} parent=5 // pred_check_branch
        %158 = sbr.rel (%p155) target = $region12
      $region11: #{tpu_custom_call.1} parent=5 // pred_region
        %s159 = ssub.s32 %s16, 1
        // Predicated region
        $region13: #{tpu_custom_call.1} parent=11 // pred_check
          %p160 = pneg %p91
        $region14: #{tpu_custom_call.1} parent=11 // pred_check_branch
          %162 = sbr.rel (%p160) target = $region16
        $region15: #{tpu_custom_call.1} parent=11 // pred_region
          %s163 = smul.u32 32, %s28
          %s165 = ssub.s32 4096, 4096
          %166 = vsyncadd [#allocation6], %s165
          %s167 = sadd.s32 %s27, %s163
          %s168 = smul.addr %s167, 128
          %s169 = scalar_lea.hbm %s1, %s168
          %s170 = sshll.u32 [#allocation5], 4
          %s171 = int_to_ptr.vmem [resolvable:$true] %s170
          %176 = dma.hbm_to_vmem [thread:$0]  %s169, 4096, %s171, [#allocation6], 128, 128, 8
        $region16: #{tpu_custom_call.1} parent=11 // pred_fallthru
          _
        // Predicated region
        $region17: #{tpu_custom_call.1} parent=11 // pred_check
          %p177 = pneg %p117
        $region18: #{tpu_custom_call.1} parent=11 // pred_check_branch
          %179 = sbr.rel (%p177) target = $region20
        $region19: #{tpu_custom_call.1} parent=11 // pred_region
          %p180 = scmp.lt.s32.totalorder %s27, 0
          %s181 = scalar_select %p180, %s27, 0
          %s182 = scalar_lea.vmem %s2, %s181
        $region20: #{tpu_custom_call.1} parent=11 // pred_fallthru
          _
      $region12: #{tpu_custom_call.1} parent=5 // pred_fallthru
        _
      %p183 = scmp.lt.s32.totalorder %s16, 2
      // Predicated region
      $region21: #{tpu_custom_call.1} parent=5 // pred_check
        %p184 = pneg %p183
      $region22: #{tpu_custom_call.1} parent=5 // pred_check_branch
        %186 = sbr.rel (%p184) target = $region24
      $region23: #{tpu_custom_call.1} parent=5 // pred_region
        // Predicated region
        $region25: #{tpu_custom_call.1} parent=23 // pred_check
          %p187 = pneg %p57
        $region26: #{tpu_custom_call.1} parent=23 // pred_check_branch
          %189 = sbr.rel (%p187) target = $region28
        $region27: #{tpu_custom_call.1} parent=23 // pred_region
          %s190 = sand.u32 %s47, 1
          %s191 = scalar_lea.sflag [#allocation3], %s190
          %s192 = sand.u32 %s47, 1
          %s193 = smul.addr %s192, 256
          %s194 = scalar_lea.vmem [#allocation2], %s193
          %s195 = smul.u32 16, %s23
          %s196 = smul.u32 2, %s25
          %s198 = ssub.s32 4096, 4096
          %199 = vsyncadd %s191, %s198
          %s200 = smul.addr %s195, 2
          %s201 = sadd.s32 %s196, %s200
          %s202 = smul.addr %s201, 128
          %s203 = scalar_lea.hbm %s0, %s202
          %s204 = sshll.u32 %s194, 4
          %s205 = int_to_ptr.vmem [resolvable:$true] %s204
          %210 = dma.hbm_to_vmem [thread:$0]  %s203, 4096, %s205, %s191, 256, 256, 16
        $region28: #{tpu_custom_call.1} parent=23 // pred_fallthru
          _
      $region24: #{tpu_custom_call.1} parent=5 // pred_fallthru
        _
      %p211 = scmp.le.s32.totalorder 1, %s16
      %p212 = scmp.lt.s32.totalorder %s16, 3
      %p213 = pnand %p211, %p212
      %p214 = pneg %p213
      // Predicated region
      $region29: #{tpu_custom_call.1} parent=5 // pred_check
        _
      $region30: #{tpu_custom_call.1} parent=5 // pred_check_branch
        %216 = sbr.rel (%p213) target = $region32
      $region31: #{tpu_custom_call.1} parent=5 // pred_region
        %s217 = ssub.s32 %s16, 1
        %s218 = sand.u32 %s50, 1
        %s219 = scalar_lea.sflag [#allocation3], %s218
        %s220 = sand.u32 %s50, 1
        %s221 = smul.addr %s220, 256
        %s222 = scalar_lea.vmem [#allocation2], %s221
        // Predicated region
        $region33: #{tpu_custom_call.1} parent=31 // pred_check
          %p223 = pneg %p63
        $region34: #{tpu_custom_call.1} parent=31 // pred_check_branch
          %225 = sbr.rel (%p223) target = $region36
        $region35: #{tpu_custom_call.1} parent=31 // pred_region
          %226 = dma.done %s219, 4096
        $region36: #{tpu_custom_call.1} parent=31 // pred_fallthru
          _
        // Predicated region
        $region37: #{tpu_custom_call.1} parent=31 // pred_check
          %p227 = pneg %p91
        $region38: #{tpu_custom_call.1} parent=31 // pred_check_branch
          %229 = sbr.rel (%p227) target = $region40
        $region39: #{tpu_custom_call.1} parent=31 // pred_region
          %230 = dma.done [#allocation6], 4096
        $region40: #{tpu_custom_call.1} parent=31 // pred_fallthru
          _
        %s231 = sand.u32 %s50, 1
        %s232 = scalar_lea.sflag [#allocation3], %s231
        %s233 = sand.u32 %s50, 1
        %s234 = smul.addr %s233, 256
        %s235 = scalar_lea.vmem [#allocation2], %s234
        %p236 = pneg %p63
        %p237 = pneg %p60
        %p238 = pneg %p91
        %p239 = pneg %p88
        %p240 = scmp.lt.s32.totalorder %s27, 0
        %s241 = scalar_select %p240, %s27, 0
        %s242 = scalar_lea.vmem %s2, %s241
        %p243 = pneg %p117
        %p244 = pneg %p114
        %p245 = pneg %p145
        %p246 = pneg %p142
        %s247 = sand.u32 %s132, 1
        %s248 = scalar_lea.sflag [#allocation4], %s247
        %s249 = sand.u32 %s132, 1
        %s250 = smul.addr %s249, 128
        %s251 = scalar_lea.vmem [#allocation7], %s250
        %s252 = smul.u32 16, %s26
        %s253 = smul.u32 2, %s28
        %s254 = smul.u32 32, %s28
        %p255 = scmp.lt.s32.totalorder %s27, 0
        %s256 = scalar_select %p255, %s27, 0
        %s257 = scalar_lea.vmem %s2, %s256
        %s258 = smul.u32 16, %s26
        %p259 = scmp.eq.s32.totalorder %s28, 0
        // Predicated region
        $region41: #{tpu_custom_call.1} parent=31 // pred_check
          %p260 = pneg %p259
        $region42: #{tpu_custom_call.1} parent=31 // pred_check_branch
          %262 = sbr.rel (%p260) target = $region44
        $region43: #{tpu_custom_call.1} parent=31 // pred_region
          %263 = vst [vmem:[%s251] sm:$0xff] 0.0
          %264 = vst [vmem:[%s251 + $0x8] sm:$0xff] 0.0
          %265 = vst [vmem:[%s251 + $0x10] sm:$0xff] 0.0
          %266 = vst [vmem:[%s251 + $0x18] sm:$0xff] 0.0
          %267 = vst [vmem:[%s251 + $0x20] sm:$0xff] 0.0
          %268 = vst [vmem:[%s251 + $0x28] sm:$0xff] 0.0
          %269 = vst [vmem:[%s251 + $0x30] sm:$0xff] 0.0
          %270 = vst [vmem:[%s251 + $0x38] sm:$0xff] 0.0
          %271 = vst [vmem:[%s251 + $0x40] sm:$0xff] 0.0
          %272 = vst [vmem:[%s251 + $0x48] sm:$0xff] 0.0
          %273 = vst [vmem:[%s251 + $0x50] sm:$0xff] 0.0
          %274 = vst [vmem:[%s251 + $0x58] sm:$0xff] 0.0
          %275 = vst [vmem:[%s251 + $0x60] sm:$0xff] 0.0
          %276 = vst [vmem:[%s251 + $0x68] sm:$0xff] 0.0
          %277 = vst [vmem:[%s251 + $0x70] sm:$0xff] 0.0
          %278 = vst [vmem:[%s251 + $0x78] sm:$0xff] 0.0
        $region44: #{tpu_custom_call.1} parent=31 // pred_fallthru
          _
        %v279 = vld [vmem:[%s251] sm:$0xff]
        %v280 = vld [vmem:[%s251 + $0x8] sm:$0xff]
        %v281 = vld [vmem:[%s251 + $0x10] sm:$0xff]
        %v282 = vld [vmem:[%s251 + $0x18] sm:$0xff]
        %v283 = vld [vmem:[%s251 + $0x20] sm:$0xff]
        %v284 = vld [vmem:[%s251 + $0x28] sm:$0xff]
        %v285 = vld [vmem:[%s251 + $0x30] sm:$0xff]
        %v286 = vld [vmem:[%s251 + $0x38] sm:$0xff]
        %v287 = vld [vmem:[%s251 + $0x40] sm:$0xff]
        %v288 = vld [vmem:[%s251 + $0x48] sm:$0xff]
        %v289 = vld [vmem:[%s251 + $0x50] sm:$0xff]
        %v290 = vld [vmem:[%s251 + $0x58] sm:$0xff]
        %v291 = vld [vmem:[%s251 + $0x60] sm:$0xff]
        %v292 = vld [vmem:[%s251 + $0x68] sm:$0xff]
        %v293 = vld [vmem:[%s251 + $0x70] sm:$0xff]
        %v294 = vld [vmem:[%s251 + $0x78] sm:$0xff]
        %v295 = vld [vmem:[%s222] sm:$0xff]
        %v296 = vld [vmem:[%s222 + $0x8] sm:$0xff]
        %v297 = vld [vmem:[%s222 + $0x10] sm:$0xff]
        %v298 = vld [vmem:[%s222 + $0x18] sm:$0xff]
        %v299 = vld [vmem:[%s222 + $0x20] sm:$0xff]
        %v300 = vld [vmem:[%s222 + $0x28] sm:$0xff]
        %v301 = vld [vmem:[%s222 + $0x30] sm:$0xff]
        %v302 = vld [vmem:[%s222 + $0x38] sm:$0xff]
        %v303 = vld [vmem:[%s222 + $0x40] sm:$0xff]
        %v304 = vld [vmem:[%s222 + $0x48] sm:$0xff]
        %v305 = vld [vmem:[%s222 + $0x50] sm:$0xff]
        %v306 = vld [vmem:[%s222 + $0x58] sm:$0xff]
        %v307 = vld [vmem:[%s222 + $0x60] sm:$0xff]
        %v308 = vld [vmem:[%s222 + $0x68] sm:$0xff]
        %v309 = vld [vmem:[%s222 + $0x70] sm:$0xff]
        %v310 = vld [vmem:[%s222 + $0x78] sm:$0xff]
        %v311 = vld [vmem:[%s222 + $0x80] sm:$0xff]
        %v312 = vld [vmem:[%s222 + $0x88] sm:$0xff]
        %v313 = vld [vmem:[%s222 + $0x90] sm:$0xff]
        %v314 = vld [vmem:[%s222 + $0x98] sm:$0xff]
        %v315 = vld [vmem:[%s222 + $0xa0] sm:$0xff]
        %v316 = vld [vmem:[%s222 + $0xa8] sm:$0xff]
        %v317 = vld [vmem:[%s222 + $0xb0] sm:$0xff]
        %v318 = vld [vmem:[%s222 + $0xb8] sm:$0xff]
        %v319 = vld [vmem:[%s222 + $0xc0] sm:$0xff]
        %v320 = vld [vmem:[%s222 + $0xc8] sm:$0xff]
        %v321 = vld [vmem:[%s222 + $0xd0] sm:$0xff]
        %v322 = vld [vmem:[%s222 + $0xd8] sm:$0xff]
        %v323 = vld [vmem:[%s222 + $0xe0] sm:$0xff]
        %v324 = vld [vmem:[%s222 + $0xe8] sm:$0xff]
        %v325 = vld [vmem:[%s222 + $0xf0] sm:$0xff]
        %v326 = vld [vmem:[%s222 + $0xf8] sm:$0xff]
        %v327 = vld [vmem:[#allocation5] sm:$0xff]
        %v328 = vld [vmem:[#allocation5 + $0x8] sm:$0xff]
        %v329 = vld [vmem:[#allocation5 + $0x10] sm:$0xff]
        %v330 = vld [vmem:[#allocation5 + $0x18] sm:$0xff]
        %v331 = vld [vmem:[#allocation5 + $0x20] sm:$0xff]
        %v332 = vld [vmem:[#allocation5 + $0x28] sm:$0xff]
        %v333 = vld [vmem:[#allocation5 + $0x30] sm:$0xff]
        %v334 = vld [vmem:[#allocation5 + $0x38] sm:$0xff]
        %v335 = vld [vmem:[#allocation5 + $0x40] sm:$0xff]
        %v336 = vld [vmem:[#allocation5 + $0x48] sm:$0xff]
        %v337 = vld [vmem:[#allocation5 + $0x50] sm:$0xff]
        %v338 = vld [vmem:[#allocation5 + $0x58] sm:$0xff]
        %v339 = vld [vmem:[#allocation5 + $0x60] sm:$0xff]
        %v340 = vld [vmem:[#allocation5 + $0x68] sm:$0xff]
        %v341 = vld [vmem:[#allocation5 + $0x70] sm:$0xff]
        %v342 = vld [vmem:[#allocation5 + $0x78] sm:$0xff]
        %v343 = vld [vmem:[#allocation5 + $0x80] sm:$0xff]
        %v344 = vld [vmem:[#allocation5 + $0x88] sm:$0xff]
        %v345 = vld [vmem:[#allocation5 + $0x90] sm:$0xff]
        %v346 = vld [vmem:[#allocation5 + $0x98] sm:$0xff]
        %v347 = vld [vmem:[#allocation5 + $0xa0] sm:$0xff]
        %v348 = vld [vmem:[#allocation5 + $0xa8] sm:$0xff]
        %v349 = vld [vmem:[#allocation5 + $0xb0] sm:$0xff]
        %v350 = vld [vmem:[#allocation5 + $0xb8] sm:$0xff]
        %v351 = vld [vmem:[#allocation5 + $0xc0] sm:$0xff]
        %v352 = vld [vmem:[#allocation5 + $0xc8] sm:$0xff]
        %v353 = vld [vmem:[#allocation5 + $0xd0] sm:$0xff]
        %v354 = vld [vmem:[#allocation5 + $0xd8] sm:$0xff]
        %v355 = vld [vmem:[#allocation5 + $0xe0] sm:$0xff]
        %v356 = vld [vmem:[#allocation5 + $0xe8] sm:$0xff]
        %v357 = vld [vmem:[#allocation5 + $0xf0] sm:$0xff]
        %v358 = vld [vmem:[#allocation5 + $0xf8] sm:$0xff]
        %359 = vmatprep.subr.mxu0 0.0
        %v360 = vand.u32 %v327, 4294901760
        %361 = vmatpush1.msra.mxu0 %v360
        %362 = vmatprep.subr.mxu0 0.0
        %v363 = vand.u32 %v328, 4294901760
        %364 = vmatpush1.msra.mxu0 %v363
        %365 = vmatprep.subr.mxu0 0.0
        %v366 = vand.u32 %v329, 4294901760
        %367 = vmatpush1.msra.mxu0 %v366
        %368 = vmatprep.subr.mxu0 0.0
        %v369 = vand.u32 %v330, 4294901760
        %370 = vmatpush1.msra.mxu0 %v369
        %371 = vmatprep.subr.mxu0 0.0
        %v372 = vand.u32 %v331, 4294901760
        %373 = vmatpush1.msra.mxu0 %v372
        %374 = vmatprep.subr.mxu0 0.0
        %v375 = vand.u32 %v332, 4294901760
        %376 = vmatpush1.msra.mxu0 %v375
        %377 = vmatprep.subr.mxu0 0.0
        %v378 = vand.u32 %v333, 4294901760
        %379 = vmatpush1.msra.mxu0 %v378
        %380 = vmatprep.subr.mxu0 0.0
        %v381 = vand.u32 %v334, 4294901760
        %382 = vmatpush1.msra.mxu0 %v381
        %383 = vmatprep.subr.mxu0 0.0
        %v384 = vand.u32 %v335, 4294901760
        %385 = vmatpush1.msra.mxu0 %v384
        %386 = vmatprep.subr.mxu0 0.0
        %v387 = vand.u32 %v336, 4294901760
        %388 = vmatpush1.msra.mxu0 %v387
        %389 = vmatprep.subr.mxu0 0.0
        %v390 = vand.u32 %v337, 4294901760
        %391 = vmatpush1.msra.mxu0 %v390
        %392 = vmatprep.subr.mxu0 0.0
        %v393 = vand.u32 %v338, 4294901760
        %394 = vmatpush1.msra.mxu0 %v393
        %395 = vmatprep.subr.mxu0 0.0
        %v396 = vand.u32 %v339, 4294901760
        %397 = vmatpush1.msra.mxu0 %v396
        %398 = vmatprep.subr.mxu0 0.0
        %v399 = vand.u32 %v340, 4294901760
        %400 = vmatpush1.msra.mxu0 %v399
        %401 = vmatprep.subr.mxu0 0.0
        %v402 = vand.u32 %v341, 4294901760
        %403 = vmatpush1.msra.mxu0 %v402
        %404 = vmatprep.subr.mxu0 0.0
        %v405 = vand.u32 %v342, 4294901760
        %406 = vmatpush1.msra.mxu0 %v405
        %407 = vmatprep.subr.mxu0 0.0
        %v408 = vand.u32 %v343, 4294901760
        %409 = vmatpush1.msra.mxu0 %v408
        %410 = vmatprep.subr.mxu0 0.0
        %v411 = vand.u32 %v344, 4294901760
        %412 = vmatpush1.msra.mxu0 %v411
        %413 = vmatprep.subr.mxu0 0.0
        %v414 = vand.u32 %v345, 4294901760
        %415 = vmatpush1.msra.mxu0 %v414
        %416 = vmatprep.subr.mxu0 0.0
        %v417 = vand.u32 %v346, 4294901760
        %418 = vmatpush1.msra.mxu0 %v417
        %419 = vmatprep.subr.mxu0 0.0
        %v420 = vand.u32 %v347, 4294901760
        %421 = vmatpush1.msra.mxu0 %v420
        %422 = vmatprep.subr.mxu0 0.0
        %v423 = vand.u32 %v348, 4294901760
        %424 = vmatpush1.msra.mxu0 %v423
        %425 = vmatprep.subr.mxu0 0.0
        %v426 = vand.u32 %v349, 4294901760
        %427 = vmatpush1.msra.mxu0 %v426
        %428 = vmatprep.subr.mxu0 0.0
        %v429 = vand.u32 %v350, 4294901760
        %430 = vmatpush1.msra.mxu0 %v429
        %431 = vmatprep.subr.mxu0 0.0
        %v432 = vand.u32 %v351, 4294901760
        %433 = vmatpush1.msra.mxu0 %v432
        %434 = vmatprep.subr.mxu0 0.0
        %v435 = vand.u32 %v352, 4294901760
        %436 = vmatpush1.msra.mxu0 %v435
        %437 = vmatprep.subr.mxu0 0.0
        %v438 = vand.u32 %v353, 4294901760
        %439 = vmatpush1.msra.mxu0 %v438
        %440 = vmatprep.subr.mxu0 0.0
        %v441 = vand.u32 %v354, 4294901760
        %442 = vmatpush1.msra.mxu0 %v441
        %443 = vmatprep.subr.mxu0 0.0
        %v444 = vand.u32 %v355, 4294901760
        %445 = vmatpush1.msra.mxu0 %v444
        %446 = vmatprep.subr.mxu0 0.0
        %v447 = vand.u32 %v356, 4294901760
        %448 = vmatpush1.msra.mxu0 %v447
        %449 = vmatprep.subr.mxu0 0.0
        %v450 = vand.u32 %v357, 4294901760
        %451 = vmatpush1.msra.mxu0 %v450
        %452 = vmatprep.subr.mxu0 0.0
        %v453 = vand.u32 %v358, 4294901760
        %454 = vmatpush1.msra.mxu0 %v453
        %v455 = vand.u32 %v296, 4294901760
        %v456 = vsub.f32 %v296, %v455
        %v457 = vand.u32 %v456, 4294901760
        %v458 = vsub.f32 %v456, %v457
        %v459 = vand.u32 %v458, 4294901760
        %460 = vmatprep.mubr.f32.mxu0 %v459
        %v461 = vand.u32 %v295, 4294901760
        %v462 = vsub.f32 %v295, %v461
        %v463 = vand.u32 %v462, 4294901760
        %v464 = vsub.f32 %v462, %v463
        %v465 = vand.u32 %v464, 4294901760
        %466 = vmatmul.mubr.f32.gmra.mrb[0].mxu0 %v465
        %v467 = vpop.f32.mrb[0].mxu0
        %v468 = vadd.f32 0.0, %v467
        %v469 = vpop.f32.mrb[0].mxu0
        %v470 = vand.u32 %v298, 4294901760
        %v471 = vsub.f32 %v298, %v470
        %v472 = vand.u32 %v471, 4294901760
        %v473 = vsub.f32 %v471, %v472
        %v474 = vand.u32 %v473, 4294901760
        %475 = vmatprep.mubr.f32.mxu0 %v474
        %v476 = vand.u32 %v297, 4294901760
        %v477 = vsub.f32 %v297, %v476
        %v478 = vand.u32 %v477, 4294901760
        %v479 = vsub.f32 %v477, %v478
        %v480 = vand.u32 %v479, 4294901760
        %481 = vmatmul.mubr.f32.gmra.mrb[0].mxu0 %v480
        %v482 = vpop.f32.mrb[0].mxu0
        %v483 = vadd.f32 0.0, %v482
        %v484 = vpop.f32.mrb[0].mxu0
        %v485 = vand.u32 %v300, 4294901760
        %v486 = vsub.f32 %v300, %v485
        %v487 = vand.u32 %v486, 4294901760
        %v488 = vsub.f32 %v486, %v487
        %v489 = vand.u32 %v488, 4294901760
        %490 = vmatprep.mubr.f32.mxu0 %v489
        %v491 = vand.u32 %v299, 4294901760
        %v492 = vsub.f32 %v299, %v491
        %v493 = vand.u32 %v492, 4294901760
        %v494 = vsub.f32 %v492, %v493
        %v495 = vand.u32 %v494, 4294901760
        %496 = vmatmul.mubr.f32.gmra.mrb[0].mxu0 %v495
        %v497 = vpop.f32.mrb[0].mxu0
        %v498 = vadd.f32 0.0, %v497
        %v499 = vpop.f32.mrb[0].mxu0
        %v500 = vand.u32 %v302, 4294901760
        %v501 = vsub.f32 %v302, %v500
        %v502 = vand.u32 %v501, 4294901760
        %v503 = vsub.f32 %v501, %v502
        %v504 = vand.u32 %v503, 4294901760
        %505 = vmatprep.mubr.f32.mxu0 %v504
        %v506 = vand.u32 %v301, 4294901760
        %v507 = vsub.f32 %v301, %v506
        %v508 = vand.u32 %v507, 4294901760
        %v509 = vsub.f32 %v507, %v508
        %v510 = vand.u32 %v509, 4294901760
        %511 = vmatmul.mubr.f32.gmra.mrb[0].mxu0 %v510
        %v512 = vpop.f32.mrb[0].mxu0
        %v513 = vadd.f32 0.0, %v512
        %v514 = vpop.f32.mrb[0].mxu0
        %v515 = vand.u32 %v304, 4294901760
        %v516 = vsub.f32 %v304, %v515
        %v517 = vand.u32 %v516, 4294901760
        %v518 = vsub.f32 %v516, %v517
        %v519 = vand.u32 %v518, 4294901760
        %520 = vmatprep.mubr.f32.mxu0 %v519
        %v521 = vand.u32 %v303, 4294901760
        %v522 = vsub.f32 %v303, %v521
        %v523 = vand.u32 %v522, 4294901760
        %v524 = vsub.f32 %v522, %v523
        %v525 = vand.u32 %v524, 4294901760
        %526 = vmatmul.mubr.f32.gmra.mrb[0].mxu0 %v525
        %v527 = vpop.f32.mrb[0].mxu0
        %v528 = vadd.f32 0.0, %v527
        %v529 = vpop.f32.mrb[0].mxu0
        %v530 = vand.u32 %v306, 4294901760
        %v531 = vsub.f32 %v306, %v530
        %v532 = vand.u32 %v531, 4294901760
        %v533 = vsub.f32 %v531, %v532
        %v534 = vand.u32 %v533, 4294901760
        %535 = vmatprep.mubr.f32.mxu0 %v534
        %v536 = vand.u32 %v305, 4294901760
        %v537 = vsub.f32 %v305, %v536
        %v538 = vand.u32 %v537, 4294901760
        %v539 = vsub.f32 %v537, %v538
        %v540 = vand.u32 %v539, 4294901760
        %541 = vmatmul.mubr.f32.gmra.mrb[0].mxu0 %v540
        %v542 = vpop.f32.mrb[0].mxu0
        %v543 = vadd.f32 0.0, %v542
        %v544 = vpop.f32.mrb[0].mxu0
        %v545 = vand.u32 %v308, 4294901760
        %v546 = vsub.f32 %v308, %v545
        %v547 = vand.u32 %v546, 4294901760
        %v548 = vsub.f32 %v546, %v547
        %v549 = vand.u32 %v548, 4294901760
        %550 = vmatprep.mubr.f32.mxu0 %v549
        %v551 = vand.u32 %v307, 4294901760
        %v552 = vsub.f32 %v307, %v551
        %v553 = vand.u32 %v552, 4294901760
        %v554 = vsub.f32 %v552, %v553
        %v555 = vand.u32 %v554, 4294901760
        %556 = vmatmul.mubr.f32.gmra.mrb[0].mxu0 %v555
        %v557 = vpop.f32.mrb[0].mxu0
        %v558 = vadd.f32 0.0, %v557
        %v559 = vpop.f32.mrb[0].mxu0
        %v560 = vand.u32 %v310, 4294901760
        %v561 = vsub.f32 %v310, %v560
        %v562 = vand.u32 %v561, 4294901760
        %v563 = vsub.f32 %v561, %v562
        %v564 = vand.u32 %v563, 4294901760
        %565 = vmatprep.mubr.f32.mxu0 %v564
        %v566 = vand.u32 %v309, 4294901760
        %v567 = vsub.f32 %v309, %v566
        %v568 = vand.u32 %v567, 4294901760
        %v569 = vsub.f32 %v567, %v568
        %v570 = vand.u32 %v569, 4294901760
        %571 = vmatmul.mubr.f32.gmra.mrb[0].mxu0 %v570
        %v572 = vpop.f32.mrb[0].mxu0
        %v573 = vadd.f32 0.0, %v572
        %v574 = vpop.f32.mrb[0].mxu0
        %v575 = vand.u32 %v312, 4294901760
        %v576 = vsub.f32 %v312, %v575
        %v577 = vand.u32 %v576, 4294901760
        %v578 = vsub.f32 %v576, %v577
        %v579 = vand.u32 %v578, 4294901760
        %580 = vmatprep.mubr.f32.mxu0 %v579
        %v581 = vand.u32 %v311, 4294901760
        %v582 = vsub.f32 %v311, %v581
        %v583 = vand.u32 %v582, 4294901760
        %v584 = vsub.f32 %v582, %v583
        %v585 = vand.u32 %v584, 4294901760
        %586 = vmatmul.mubr.f32.gmra.mrb[0].mxu0 %v585
        %v587 = vpop.f32.mrb[0].mxu0
        %v588 = vadd.f32 0.0, %v587
        %v589 = vpop.f32.mrb[0].mxu0
        %v590 = vand.u32 %v314, 4294901760
        %v591 = vsub.f32 %v314, %v590
        %v592 = vand.u32 %v591, 4294901760
        %v593 = vsub.f32 %v591, %v592
        %v594 = vand.u32 %v593, 4294901760
        %595 = vmatprep.mubr.f32.mxu0 %v594
        %v596 = vand.u32 %v313, 4294901760
        %v597 = vsub.f32 %v313, %v596
        %v598 = vand.u32 %v597, 4294901760
        %v599 = vsub.f32 %v597, %v598
        %v600 = vand.u32 %v599, 4294901760
        %601 = vmatmul.mubr.f32.gmra.mrb[0].mxu0 %v600
        %v602 = vpop.f32.mrb[0].mxu0
        %v603 = vadd.f32 0.0, %v602
        %v604 = vpop.f32.mrb[0].mxu0
        %v605 = vand.u32 %v316, 4294901760
        %v606 = vsub.f32 %v316, %v605
        %v607 = vand.u32 %v606, 4294901760
        %v608 = vsub.f32 %v606, %v607
        %v609 = vand.u32 %v608, 4294901760
        %610 = vmatprep.mubr.f32.mxu0 %v609
        %v611 = vand.u32 %v315, 4294901760
        %v612 = vsub.f32 %v315, %v611
        %v613 = vand.u32 %v612, 4294901760
        %v614 = vsub.f32 %v612, %v613
        %v615 = vand.u32 %v614, 4294901760
        %616 = vmatmul.mubr.f32.gmra.mrb[0].mxu0 %v615
        %v617 = vpop.f32.mrb[0].mxu0
        %v618 = vadd.f32 0.0, %v617
        %v619 = vpop.f32.mrb[0].mxu0
        %v620 = vand.u32 %v318, 4294901760
        %v621 = vsub.f32 %v318, %v620
        %v622 = vand.u32 %v621, 4294901760
        %v623 = vsub.f32 %v621, %v622
        %v624 = vand.u32 %v623, 4294901760
        %625 = vmatprep.mubr.f32.mxu0 %v624
        %v626 = vand.u32 %v317, 4294901760
        %v627 = vsub.f32 %v317, %v626
        %v628 = vand.u32 %v627, 4294901760
        %v629 = vsub.f32 %v627, %v628
        %v630 = vand.u32 %v629, 4294901760
        %631 = vmatmul.mubr.f32.gmra.mrb[0].mxu0 %v630
        %v632 = vpop.f32.mrb[0].mxu0
        %v633 = vadd.f32 0.0, %v632
        %v634 = vpop.f32.mrb[0].mxu0
        %v635 = vand.u32 %v320, 4294901760
        %v636 = vsub.f32 %v320, %v635
        %v637 = vand.u32 %v636, 4294901760
        %v638 = vsub.f32 %v636, %v637
        %v639 = vand.u32 %v638, 4294901760
        %640 = vmatprep.mubr.f32.mxu0 %v639
        %v641 = vand.u32 %v319, 4294901760
        %v642 = vsub.f32 %v319, %v641
        %v643 = vand.u32 %v642, 4294901760
        %v644 = vsub.f32 %v642, %v643
        %v645 = vand.u32 %v644, 4294901760
        %646 = vmatmul.mubr.f32.gmra.mrb[0].mxu0 %v645
        %v647 = vpop.f32.mrb[0].mxu0
        %v648 = vadd.f32 0.0, %v647
        %v649 = vpop.f32.mrb[0].mxu0
        %v650 = vand.u32 %v322, 4294901760
        %v651 = vsub.f32 %v322, %v650
        %v652 = vand.u32 %v651, 4294901760
        %v653 = vsub.f32 %v651, %v652
        %v654 = vand.u32 %v653, 4294901760
        %655 = vmatprep.mubr.f32.mxu0 %v654
        %v656 = vand.u32 %v321, 4294901760
        %v657 = vsub.f32 %v321, %v656
        %v658 = vand.u32 %v657, 4294901760
        %v659 = vsub.f32 %v657, %v658
        %v660 = vand.u32 %v659, 4294901760
        %661 = vmatmul.mubr.f32.gmra.mrb[0].mxu0 %v660
        %v662 = vpop.f32.mrb[0].mxu0
        %v663 = vadd.f32 0.0, %v662
        %v664 = vpop.f32.mrb[0].mxu0
        %v665 = vand.u32 %v324, 4294901760
        %v666 = vsub.f32 %v324, %v665
        %v667 = vand.u32 %v666, 4294901760
        %v668 = vsub.f32 %v666, %v667
        %v669 = vand.u32 %v668, 4294901760
        %670 = vmatprep.mubr.f32.mxu0 %v669
        %v671 = vand.u32 %v323, 4294901760
        %v672 = vsub.f32 %v323, %v671
        %v673 = vand.u32 %v672, 4294901760
        %v674 = vsub.f32 %v672, %v673
        %v675 = vand.u32 %v674, 4294901760
        %676 = vmatmul.mubr.f32.gmra.mrb[0].mxu0 %v675
        %v677 = vpop.f32.mrb[0].mxu0
        %v678 = vadd.f32 0.0, %v677
        %v679 = vpop.f32.mrb[0].mxu0
        %v680 = vand.u32 %v326, 4294901760
        %v681 = vsub.f32 %v326, %v680
        %v682 = vand.u32 %v681, 4294901760
        %v683 = vsub.f32 %v681, %v682
        %v684 = vand.u32 %v683, 4294901760
        %685 = vmatprep.mubr.f32.mxu0 %v684
        %v686 = vand.u32 %v325, 4294901760
        %v687 = vsub.f32 %v325, %v686
        %v688 = vand.u32 %v687, 4294901760
        %v689 = vsub.f32 %v687, %v688
        %v690 = vand.u32 %v689, 4294901760
        %691 = vmatmul.mubr.f32.gmra.mrb[0].mxu0 %v690
        %v692 = vpop.f32.mrb[0].mxu0
        %v693 = vadd.f32 0.0, %v692
        %v694 = vpop.f32.mrb[0].mxu0
        %695 = vdwg.mxu0
        %696 = vmatprep.subr.mxu0 0.0
        %v697 = vand.u32 %v327, 4294901760
        %v698 = vsub.f32 %v327, %v697
        %v699 = vand.u32 %v698, 4294901760
        %v700 = vsub.f32 %v698, %v699
        %v701 = vand.u32 %v700, 4294901760
        %702 = vmatpush1.msra.mxu0 %v701
        %703 = vmatprep.subr.mxu0 0.0
        %v704 = vand.u32 %v328, 4294901760
        %v705 = vsub.f32 %v328, %v704
        %v706 = vand.u32 %v705, 4294901760
        %v707 = vsub.f32 %v705, %v706
        %v708 = vand.u32 %v707, 4294901760
        %709 = vmatpush1.msra.mxu0 %v708
        %710 = vmatprep.subr.mxu0 0.0
        %v711 = vand.u32 %v329, 4294901760
        %v712 = vsub.f32 %v329, %v711
        %v713 = vand.u32 %v712, 4294901760
        %v714 = vsub.f32 %v712, %v713
        %v715 = vand.u32 %v714, 4294901760
        %716 = vmatpush1.msra.mxu0 %v715
        %717 = vmatprep.subr.mxu0 0.0
        %v718 = vand.u32 %v330, 4294901760
        %v719 = vsub.f32 %v330, %v718
        %v720 = vand.u32 %v719, 4294901760
        %v721 = vsub.f32 %v719, %v720
        %v722 = vand.u32 %v721, 4294901760
        %723 = vmatpush1.msra.mxu0 %v722
        %724 = vmatprep.subr.mxu0 0.0
        %v725 = vand.u32 %v331, 4294901760
        %v726 = vsub.f32 %v331, %v725
        %v727 = vand.u32 %v726, 4294901760
        %v728 = vsub.f32 %v726, %v727
        %v729 = vand.u32 %v728, 4294901760
        %730 = vmatpush1.msra.mxu0 %v729
        %731 = vmatprep.subr.mxu0 0.0
        %v732 = vand.u32 %v332, 4294901760
        %v733 = vsub.f32 %v332, %v732
        %v734 = vand.u32 %v733, 4294901760
        %v735 = vsub.f32 %v733, %v734
        %v736 = vand.u32 %v735, 4294901760
        %737 = vmatpush1.msra.mxu0 %v736
        %738 = vmatprep.subr.mxu0 0.0
        %v739 = vand.u32 %v333, 4294901760
        %v740 = vsub.f32 %v333, %v739
        %v741 = vand.u32 %v740, 4294901760
        %v742 = vsub.f32 %v740, %v741
        %v743 = vand.u32 %v742, 4294901760
        %744 = vmatpush1.msra.mxu0 %v743
        %745 = vmatprep.subr.mxu0 0.0
        %v746 = vand.u32 %v334, 4294901760
        %v747 = vsub.f32 %v334, %v746
        %v748 = vand.u32 %v747, 4294901760
        %v749 = vsub.f32 %v747, %v748
        %v750 = vand.u32 %v749, 4294901760
        %751 = vmatpush1.msra.mxu0 %v750
        %752 = vmatprep.subr.mxu0 0.0
        %v753 = vand.u32 %v335, 4294901760
        %v754 = vsub.f32 %v335, %v753
        %v755 = vand.u32 %v754, 4294901760
        %v756 = vsub.f32 %v754, %v755
        %v757 = vand.u32 %v756, 4294901760
        %758 = vmatpush1.msra.mxu0 %v757
        %759 = vmatprep.subr.mxu0 0.0
        %v760 = vand.u32 %v336, 4294901760
        %v761 = vsub.f32 %v336, %v760
        %v762 = vand.u32 %v761, 4294901760
        %v763 = vsub.f32 %v761, %v762
        %v764 = vand.u32 %v763, 4294901760
        %765 = vmatpush1.msra.mxu0 %v764
        %766 = vmatprep.subr.mxu0 0.0
        %v767 = vand.u32 %v337, 4294901760
        %v768 = vsub.f32 %v337, %v767
        %v769 = vand.u32 %v768, 4294901760
        %v770 = vsub.f32 %v768, %v769
        %v771 = vand.u32 %v770, 4294901760
        %772 = vmatpush1.msra.mxu0 %v771
        %773 = vmatprep.subr.mxu0 0.0
        %v774 = vand.u32 %v338, 4294901760
        %v775 = vsub.f32 %v338, %v774
        %v776 = vand.u32 %v775, 4294901760
        %v777 = vsub.f32 %v775, %v776
        %v778 = vand.u32 %v777, 4294901760
        %779 = vmatpush1.msra.mxu0 %v778
        %780 = vmatprep.subr.mxu0 0.0
        %v781 = vand.u32 %v339, 4294901760
        %v782 = vsub.f32 %v339, %v781
        %v783 = vand.u32 %v782, 4294901760
        %v784 = vsub.f32 %v782, %v783
        %v785 = vand.u32 %v784, 4294901760
        %786 = vmatpush1.msra.mxu0 %v785
        %787 = vmatprep.subr.mxu0 0.0
        %v788 = vand.u32 %v340, 4294901760
        %v789 = vsub.f32 %v340, %v788
        %v790 = vand.u32 %v789, 4294901760
        %v791 = vsub.f32 %v789, %v790
        %v792 = vand.u32 %v791, 4294901760
        %793 = vmatpush1.msra.mxu0 %v792
        %794 = vmatprep.subr.mxu0 0.0
        %v795 = vand.u32 %v341, 4294901760
        %v796 = vsub.f32 %v341, %v795
        %v797 = vand.u32 %v796, 4294901760
        %v798 = vsub.f32 %v796, %v797
        %v799 = vand.u32 %v798, 4294901760
        %800 = vmatpush1.msra.mxu0 %v799
        %801 = vmatprep.subr.mxu0 0.0
        %v802 = vand.u32 %v342, 4294901760
        %v803 = vsub.f32 %v342, %v802
        %v804 = vand.u32 %v803, 4294901760
        %v805 = vsub.f32 %v803, %v804
        %v806 = vand.u32 %v805, 4294901760
        %807 = vmatpush1.msra.mxu0 %v806
        %808 = vmatprep.subr.mxu0 0.0
        %v809 = vand.u32 %v343, 4294901760
        %v810 = vsub.f32 %v343, %v809
        %v811 = vand.u32 %v810, 4294901760
        %v812 = vsub.f32 %v810, %v811
        %v813 = vand.u32 %v812, 4294901760
        %814 = vmatpush1.msra.mxu0 %v813
        %815 = vmatprep.subr.mxu0 0.0
        %v816 = vand.u32 %v344, 4294901760
        %v817 = vsub.f32 %v344, %v816
        %v818 = vand.u32 %v817, 4294901760
        %v819 = vsub.f32 %v817, %v818
        %v820 = vand.u32 %v819, 4294901760
        %821 = vmatpush1.msra.mxu0 %v820
        %822 = vmatprep.subr.mxu0 0.0
        %v823 = vand.u32 %v345, 4294901760
        %v824 = vsub.f32 %v345, %v823
        %v825 = vand.u32 %v824, 4294901760
        %v826 = vsub.f32 %v824, %v825
        %v827 = vand.u32 %v826, 4294901760
        %828 = vmatpush1.msra.mxu0 %v827
        %829 = vmatprep.subr.mxu0 0.0
        %v830 = vand.u32 %v346, 4294901760
        %v831 = vsub.f32 %v346, %v830
        %v832 = vand.u32 %v831, 4294901760
        %v833 = vsub.f32 %v831, %v832
        %v834 = vand.u32 %v833, 4294901760
        %835 = vmatpush1.msra.mxu0 %v834
        %836 = vmatprep.subr.mxu0 0.0
        %v837 = vand.u32 %v347, 4294901760
        %v838 = vsub.f32 %v347, %v837
        %v839 = vand.u32 %v838, 4294901760
        %v840 = vsub.f32 %v838, %v839
        %v841 = vand.u32 %v840, 4294901760
        %842 = vmatpush1.msra.mxu0 %v841
        %843 = vmatprep.subr.mxu0 0.0
        %v844 = vand.u32 %v348, 4294901760
        %v845 = vsub.f32 %v348, %v844
        %v846 = vand.u32 %v845, 4294901760
        %v847 = vsub.f32 %v845, %v846
        %v848 = vand.u32 %v847, 4294901760
        %849 = vmatpush1.msra.mxu0 %v848
        %850 = vmatprep.subr.mxu0 0.0
        %v851 = vand.u32 %v349, 4294901760
        %v852 = vsub.f32 %v349, %v851
        %v853 = vand.u32 %v852, 4294901760
        %v854 = vsub.f32 %v852, %v853
        %v855 = vand.u32 %v854, 4294901760
        %856 = vmatpush1.msra.mxu0 %v855
        %857 = vmatprep.subr.mxu0 0.0
        %v858 = vand.u32 %v350, 4294901760
        %v859 = vsub.f32 %v350, %v858
        %v860 = vand.u32 %v859, 4294901760
        %v861 = vsub.f32 %v859, %v860
        %v862 = vand.u32 %v861, 4294901760
        %863 = vmatpush1.msra.mxu0 %v862
        %864 = vmatprep.subr.mxu0 0.0
        %v865 = vand.u32 %v351, 4294901760
        %v866 = vsub.f32 %v351, %v865
        %v867 = vand.u32 %v866, 4294901760
        %v868 = vsub.f32 %v866, %v867
        %v869 = vand.u32 %v868, 4294901760
        %870 = vmatpush1.msra.mxu0 %v869
        %871 = vmatprep.subr.mxu0 0.0
        %v872 = vand.u32 %v352, 4294901760
        %v873 = vsub.f32 %v352, %v872
        %v874 = vand.u32 %v873, 4294901760
        %v875 = vsub.f32 %v873, %v874
        %v876 = vand.u32 %v875, 4294901760
        %877 = vmatpush1.msra.mxu0 %v876
        %878 = vmatprep.subr.mxu0 0.0
        %v879 = vand.u32 %v353, 4294901760
        %v880 = vsub.f32 %v353, %v879
        %v881 = vand.u32 %v880, 4294901760
        %v882 = vsub.f32 %v880, %v881
        %v883 = vand.u32 %v882, 4294901760
        %884 = vmatpush1.msra.mxu0 %v883
        %885 = vmatprep.subr.mxu0 0.0
        %v886 = vand.u32 %v354, 4294901760
        %v887 = vsub.f32 %v354, %v886
        %v888 = vand.u32 %v887, 4294901760
        %v889 = vsub.f32 %v887, %v888
        %v890 = vand.u32 %v889, 4294901760
        %891 = vmatpush1.msra.mxu0 %v890
        %892 = vmatprep.subr.mxu0 0.0
        %v893 = vand.u32 %v355, 4294901760
        %v894 = vsub.f32 %v355, %v893
        %v895 = vand.u32 %v894, 4294901760
        %v896 = vsub.f32 %v894, %v895
        %v897 = vand.u32 %v896, 4294901760
        %898 = vmatpush1.msra.mxu0 %v897
        %899 = vmatprep.subr.mxu0 0.0
        %v900 = vand.u32 %v356, 4294901760
        %v901 = vsub.f32 %v356, %v900
        %v902 = vand.u32 %v901, 4294901760
        %v903 = vsub.f32 %v901, %v902
        %v904 = vand.u32 %v903, 4294901760
        %905 = vmatpush1.msra.mxu0 %v904
        %906 = vmatprep.subr.mxu0 0.0
        %v907 = vand.u32 %v357, 4294901760
        %v908 = vsub.f32 %v357, %v907
        %v909 = vand.u32 %v908, 4294901760
        %v910 = vsub.f32 %v908, %v909
        %v911 = vand.u32 %v910, 4294901760
        %912 = vmatpush1.msra.mxu0 %v911
        %913 = vmatprep.subr.mxu0 0.0
        %v914 = vand.u32 %v358, 4294901760
        %v915 = vsub.f32 %v358, %v914
        %v916 = vand.u32 %v915, 4294901760
        %v917 = vsub.f32 %v915, %v916
        %v918 = vand.u32 %v917, 4294901760
        %919 = vmatpush1.msra.mxu0 %v918
        %v920 = vand.u32 %v296, 4294901760
        %921 = vmatprep.mubr.f32.mxu0 %v920
        %v922 = vand.u32 %v295, 4294901760
        %923 = vmatmul.mubr.f32.gmra.mrb[0].mxu0 %v922
        %v924 = vpop.f32.mrb[0].mxu0
        %v925 = vadd.f32 %v468, %v924
        %v926 = vpop.f32.mrb[0].mxu0
        %v927 = vand.u32 %v298, 4294901760
        %928 = vmatprep.mubr.f32.mxu0 %v927
        %v929 = vand.u32 %v297, 4294901760
        %930 = vmatmul.mubr.f32.gmra.mrb[0].mxu0 %v929
        %v931 = vpop.f32.mrb[0].mxu0
        %v932 = vadd.f32 %v483, %v931
        %v933 = vpop.f32.mrb[0].mxu0
        %v934 = vand.u32 %v300, 4294901760
        %935 = vmatprep.mubr.f32.mxu0 %v934
        %v936 = vand.u32 %v299, 4294901760
        %937 = vmatmul.mubr.f32.gmra.mrb[0].mxu0 %v936
        %v938 = vpop.f32.mrb[0].mxu0
        %v939 = vadd.f32 %v498, %v938
        %v940 = vpop.f32.mrb[0].mxu0
        %v941 = vand.u32 %v302, 4294901760
        %942 = vmatprep.mubr.f32.mxu0 %v941
        %v943 = vand.u32 %v301, 4294901760
        %944 = vmatmul.mubr.f32.gmra.mrb[0].mxu0 %v943
        %v945 = vpop.f32.mrb[0].mxu0
        %v946 = vadd.f32 %v513, %v945
        %v947 = vpop.f32.mrb[0].mxu0
        %v948 = vand.u32 %v304, 4294901760
        %949 = vmatprep.mubr.f32.mxu0 %v948
        %v950 = vand.u32 %v303, 4294901760
        %951 = vmatmul.mubr.f32.gmra.mrb[0].mxu0 %v950
        %v952 = vpop.f32.mrb[0].mxu0
        %v953 = vadd.f32 %v528, %v952
        %v954 = vpop.f32.mrb[0].mxu0
        %v955 = vand.u32 %v306, 4294901760
        %956 = vmatprep.mubr.f32.mxu0 %v955
        %v957 = vand.u32 %v305, 4294901760
        %958 = vmatmul.mubr.f32.gmra.mrb[0].mxu0 %v957
        %v959 = vpop.f32.mrb[0].mxu0
        %v960 = vadd.f32 %v543, %v959
        %v961 = vpop.f32.mrb[0].mxu0
        %v962 = vand.u32 %v308, 4294901760
        %963 = vmatprep.mubr.f32.mxu0 %v962
        %v964 = vand.u32 %v307, 4294901760
        %965 = vmatmul.mubr.f32.gmra.mrb[0].mxu0 %v964
        %v966 = vpop.f32.mrb[0].mxu0
        %v967 = vadd.f32 %v558, %v966
        %v968 = vpop.f32.mrb[0].mxu0
        %v969 = vand.u32 %v310, 4294901760
        %970 = vmatprep.mubr.f32.mxu0 %v969
        %v971 = vand.u32 %v309, 4294901760
        %972 = vmatmul.mubr.f32.gmra.mrb[0].mxu0 %v971
        %v973 = vpop.f32.mrb[0].mxu0
        %v974 = vadd.f32 %v573, %v973
        %v975 = vpop.f32.mrb[0].mxu0
        %v976 = vand.u32 %v312, 4294901760
        %977 = vmatprep.mubr.f32.mxu0 %v976
        %v978 = vand.u32 %v311, 4294901760
        %979 = vmatmul.mubr.f32.gmra.mrb[0].mxu0 %v978
        %v980 = vpop.f32.mrb[0].mxu0
        %v981 = vadd.f32 %v588, %v980
        %v982 = vpop.f32.mrb[0].mxu0
        %v983 = vand.u32 %v314, 4294901760
        %984 = vmatprep.mubr.f32.mxu0 %v983
        %v985 = vand.u32 %v313, 4294901760
        %986 = vmatmul.mubr.f32.gmra.mrb[0].mxu0 %v985
        %v987 = vpop.f32.mrb[0].mxu0
        %v988 = vadd.f32 %v603, %v987
        %v989 = vpop.f32.mrb[0].mxu0
        %v990 = vand.u32 %v316, 4294901760
        %991 = vmatprep.mubr.f32.mxu0 %v990
        %v992 = vand.u32 %v315, 4294901760
        %993 = vmatmul.mubr.f32.gmra.mrb[0].mxu0 %v992
        %v994 = vpop.f32.mrb[0].mxu0
        %v995 = vadd.f32 %v618, %v994
        %v996 = vpop.f32.mrb[0].mxu0
        %v997 = vand.u32 %v318, 4294901760
        %998 = vmatprep.mubr.f32.mxu0 %v997
        %v999 = vand.u32 %v317, 4294901760
        %1000 = vmatmul.mubr.f32.gmra.mrb[0].mxu0 %v999
        %v1001 = vpop.f32.mrb[0].mxu0
        %v1002 = vadd.f32 %v633, %v1001
        %v1003 = vpop.f32.mrb[0].mxu0
        %v1004 = vand.u32 %v320, 4294901760
        %1005 = vmatprep.mubr.f32.mxu0 %v1004
        %v1006 = vand.u32 %v319, 4294901760
        %1007 = vmatmul.mubr.f32.gmra.mrb[0].mxu0 %v1006
        %v1008 = vpop.f32.mrb[0].mxu0
        %v1009 = vadd.f32 %v648, %v1008
        %v1010 = vpop.f32.mrb[0].mxu0
        %v1011 = vand.u32 %v322, 4294901760
        %1012 = vmatprep.mubr.f32.mxu0 %v1011
        %v1013 = vand.u32 %v321, 4294901760
        %1014 = vmatmul.mubr.f32.gmra.mrb[0].mxu0 %v1013
        %v1015 = vpop.f32.mrb[0].mxu0
        %v1016 = vadd.f32 %v663, %v1015
        %v1017 = vpop.f32.mrb[0].mxu0
        %v1018 = vand.u32 %v324, 4294901760
        %1019 = vmatprep.mubr.f32.mxu0 %v1018
        %v1020 = vand.u32 %v323, 4294901760
        %1021 = vmatmul.mubr.f32.gmra.mrb[0].mxu0 %v1020
        %v1022 = vpop.f32.mrb[0].mxu0
        %v1023 = vadd.f32 %v678, %v1022
        %v1024 = vpop.f32.mrb[0].mxu0
        %v1025 = vand.u32 %v326, 4294901760
        %1026 = vmatprep.mubr.f32.mxu0 %v1025
        %v1027 = vand.u32 %v325, 4294901760
        %1028 = vmatmul.mubr.f32.gmra.mrb[0].mxu0 %v1027
        %v1029 = vpop.f32.mrb[0].mxu0
        %v1030 = vadd.f32 %v693, %v1029
        %v1031 = vpop.f32.mrb[0].mxu0
        %1032 = vdwg.mxu0
        %1033 = vmatprep.subr.mxu0 0.0
        %v1034 = vand.u32 %v327, 4294901760
        %v1035 = vsub.f32 %v327, %v1034
        %1036 = vmatpush1.msra.mxu0 %v1035
        %1037 = vmatprep.subr.mxu0 0.0
        %v1038 = vand.u32 %v328, 4294901760
        %v1039 = vsub.f32 %v328, %v1038
        %1040 = vmatpush1.msra.mxu0 %v1039
        %1041 = vmatprep.subr.mxu0 0.0
        %v1042 = vand.u32 %v329, 4294901760
        %v1043 = vsub.f32 %v329, %v1042
        %1044 = vmatpush1.msra.mxu0 %v1043
        %1045 = vmatprep.subr.mxu0 0.0
        %v1046 = vand.u32 %v330, 4294901760
        %v1047 = vsub.f32 %v330, %v1046
        %1048 = vmatpush1.msra.mxu0 %v1047
        %1049 = vmatprep.subr.mxu0 0.0
        %v1050 = vand.u32 %v331, 4294901760
        %v1051 = vsub.f32 %v331, %v1050
        %1052 = vmatpush1.msra.mxu0 %v1051
        %1053 = vmatprep.subr.mxu0 0.0
        %v1054 = vand.u32 %v332, 4294901760
        %v1055 = vsub.f32 %v332, %v1054
        %1056 = vmatpush1.msra.mxu0 %v1055
        %1057 = vmatprep.subr.mxu0 0.0
        %v1058 = vand.u32 %v333, 4294901760
        %v1059 = vsub.f32 %v333, %v1058
        %1060 = vmatpush1.msra.mxu0 %v1059
        %1061 = vmatprep.subr.mxu0 0.0
        %v1062 = vand.u32 %v334, 4294901760
        %v1063 = vsub.f32 %v334, %v1062
        %1064 = vmatpush1.msra.mxu0 %v1063
        %1065 = vmatprep.subr.mxu0 0.0
        %v1066 = vand.u32 %v335, 4294901760
        %v1067 = vsub.f32 %v335, %v1066
        %1068 = vmatpush1.msra.mxu0 %v1067
        %1069 = vmatprep.subr.mxu0 0.0
        %v1070 = vand.u32 %v336, 4294901760
        %v1071 = vsub.f32 %v336, %v1070
        %1072 = vmatpush1.msra.mxu0 %v1071
        %1073 = vmatprep.subr.mxu0 0.0
        %v1074 = vand.u32 %v337, 4294901760
        %v1075 = vsub.f32 %v337, %v1074
        %1076 = vmatpush1.msra.mxu0 %v1075
        %1077 = vmatprep.subr.mxu0 0.0
        %v1078 = vand.u32 %v338, 4294901760
        %v1079 = vsub.f32 %v338, %v1078
        %1080 = vmatpush1.msra.mxu0 %v1079
        %1081 = vmatprep.subr.mxu0 0.0
        %v1082 = vand.u32 %v339, 4294901760
        %v1083 = vsub.f32 %v339, %v1082
        %1084 = vmatpush1.msra.mxu0 %v1083
        %1085 = vmatprep.subr.mxu0 0.0
        %v1086 = vand.u32 %v340, 4294901760
        %v1087 = vsub.f32 %v340, %v1086
        %1088 = vmatpush1.msra.mxu0 %v1087
        %1089 = vmatprep.subr.mxu0 0.0
        %v1090 = vand.u32 %v341, 4294901760
        %v1091 = vsub.f32 %v341, %v1090
        %1092 = vmatpush1.msra.mxu0 %v1091
        %1093 = vmatprep.subr.mxu0 0.0
        %v1094 = vand.u32 %v342, 4294901760
        %v1095 = vsub.f32 %v342, %v1094
        %1096 = vmatpush1.msra.mxu0 %v1095
        %1097 = vmatprep.subr.mxu0 0.0
        %v1098 = vand.u32 %v343, 4294901760
        %v1099 = vsub.f32 %v343, %v1098
        %1100 = vmatpush1.msra.mxu0 %v1099
        %1101 = vmatprep.subr.mxu0 0.0
        %v1102 = vand.u32 %v344, 4294901760
        %v1103 = vsub.f32 %v344, %v1102
        %1104 = vmatpush1.msra.mxu0 %v1103
        %1105 = vmatprep.subr.mxu0 0.0
        %v1106 = vand.u32 %v345, 4294901760
        %v1107 = vsub.f32 %v345, %v1106
        %1108 = vmatpush1.msra.mxu0 %v1107
        %1109 = vmatprep.subr.mxu0 0.0
        %v1110 = vand.u32 %v346, 4294901760
        %v1111 = vsub.f32 %v346, %v1110
        %1112 = vmatpush1.msra.mxu0 %v1111
        %1113 = vmatprep.subr.mxu0 0.0
        %v1114 = vand.u32 %v347, 4294901760
        %v1115 = vsub.f32 %v347, %v1114
        %1116 = vmatpush1.msra.mxu0 %v1115
        %1117 = vmatprep.subr.mxu0 0.0
        %v1118 = vand.u32 %v348, 4294901760
        %v1119 = vsub.f32 %v348, %v1118
        %1120 = vmatpush1.msra.mxu0 %v1119
        %1121 = vmatprep.subr.mxu0 0.0
        %v1122 = vand.u32 %v349, 4294901760
        %v1123 = vsub.f32 %v349, %v1122
        %1124 = vmatpush1.msra.mxu0 %v1123
        %1125 = vmatprep.subr.mxu0 0.0
        %v1126 = vand.u32 %v350, 4294901760
        %v1127 = vsub.f32 %v350, %v1126
        %1128 = vmatpush1.msra.mxu0 %v1127
        %1129 = vmatprep.subr.mxu0 0.0
        %v1130 = vand.u32 %v351, 4294901760
        %v1131 = vsub.f32 %v351, %v1130
        %1132 = vmatpush1.msra.mxu0 %v1131
        %1133 = vmatprep.subr.mxu0 0.0
        %v1134 = vand.u32 %v352, 4294901760
        %v1135 = vsub.f32 %v352, %v1134
        %1136 = vmatpush1.msra.mxu0 %v1135
        %1137 = vmatprep.subr.mxu0 0.0
        %v1138 = vand.u32 %v353, 4294901760
        %v1139 = vsub.f32 %v353, %v1138
        %1140 = vmatpush1.msra.mxu0 %v1139
        %1141 = vmatprep.subr.mxu0 0.0
        %v1142 = vand.u32 %v354, 4294901760
        %v1143 = vsub.f32 %v354, %v1142
        %1144 = vmatpush1.msra.mxu0 %v1143
        %1145 = vmatprep.subr.mxu0 0.0
        %v1146 = vand.u32 %v355, 4294901760
        %v1147 = vsub.f32 %v355, %v1146
        %1148 = vmatpush1.msra.mxu0 %v1147
        %1149 = vmatprep.subr.mxu0 0.0
        %v1150 = vand.u32 %v356, 4294901760
        %v1151 = vsub.f32 %v356, %v1150
        %1152 = vmatpush1.msra.mxu0 %v1151
        %1153 = vmatprep.subr.mxu0 0.0
        %v1154 = vand.u32 %v357, 4294901760
        %v1155 = vsub.f32 %v357, %v1154
        %1156 = vmatpush1.msra.mxu0 %v1155
        %1157 = vmatprep.subr.mxu0 0.0
        %v1158 = vand.u32 %v358, 4294901760
        %v1159 = vsub.f32 %v358, %v1158
        %1160 = vmatpush1.msra.mxu0 %v1159
        %v1161 = vand.u32 %v296, 4294901760
        %v1162 = vsub.f32 %v296, %v1161
        %1163 = vmatprep.mubr.f32.mxu0 %v1162
        %v1164 = vand.u32 %v295, 4294901760
        %v1165 = vsub.f32 %v295, %v1164
        %1166 = vmatmul.mubr.f32.gmra.mrb[0].mxu0 %v1165
        %v1167 = vpop.f32.mrb[0].mxu0
        %v1168 = vadd.f32 %v925, %v1167
        %v1169 = vpop.f32.mrb[0].mxu0
        %v1170 = vand.u32 %v298, 4294901760
        %v1171 = vsub.f32 %v298, %v1170
        %1172 = vmatprep.mubr.f32.mxu0 %v1171
        %v1173 = vand.u32 %v297, 4294901760
        %v1174 = vsub.f32 %v297, %v1173
        %1175 = vmatmul.mubr.f32.gmra.mrb[0].mxu0 %v1174
        %v1176 = vpop.f32.mrb[0].mxu0
        %v1177 = vadd.f32 %v932, %v1176
        %v1178 = vpop.f32.mrb[0].mxu0
        %v1179 = vand.u32 %v300, 4294901760
        %v1180 = vsub.f32 %v300, %v1179
        %1181 = vmatprep.mubr.f32.mxu0 %v1180
        %v1182 = vand.u32 %v299, 4294901760
        %v1183 = vsub.f32 %v299, %v1182
        %1184 = vmatmul.mubr.f32.gmra.mrb[0].mxu0 %v1183
        %v1185 = vpop.f32.mrb[0].mxu0
        %v1186 = vadd.f32 %v939, %v1185
        %v1187 = vpop.f32.mrb[0].mxu0
        %v1188 = vand.u32 %v302, 4294901760
        %v1189 = vsub.f32 %v302, %v1188
        %1190 = vmatprep.mubr.f32.mxu0 %v1189
        %v1191 = vand.u32 %v301, 4294901760
        %v1192 = vsub.f32 %v301, %v1191
        %1193 = vmatmul.mubr.f32.gmra.mrb[0].mxu0 %v1192
        %v1194 = vpop.f32.mrb[0].mxu0
        %v1195 = vadd.f32 %v946, %v1194
        %v1196 = vpop.f32.mrb[0].mxu0
        %v1197 = vand.u32 %v304, 4294901760
        %v1198 = vsub.f32 %v304, %v1197
        %1199 = vmatprep.mubr.f32.mxu0 %v1198
        %v1200 = vand.u32 %v303, 4294901760
        %v1201 = vsub.f32 %v303, %v1200
        %1202 = vmatmul.mubr.f32.gmra.mrb[0].mxu0 %v1201
        %v1203 = vpop.f32.mrb[0].mxu0
        %v1204 = vadd.f32 %v953, %v1203
        %v1205 = vpop.f32.mrb[0].mxu0
        %v1206 = vand.u32 %v306, 4294901760
        %v1207 = vsub.f32 %v306, %v1206
        %1208 = vmatprep.mubr.f32.mxu0 %v1207
        %v1209 = vand.u32 %v305, 4294901760
        %v1210 = vsub.f32 %v305, %v1209
        %1211 = vmatmul.mubr.f32.gmra.mrb[0].mxu0 %v1210
        %v1212 = vpop.f32.mrb[0].mxu0
        %v1213 = vadd.f32 %v960, %v1212
        %v1214 = vpop.f32.mrb[0].mxu0
        %v1215 = vand.u32 %v308, 4294901760
        %v1216 = vsub.f32 %v308, %v1215
        %1217 = vmatprep.mubr.f32.mxu0 %v1216
        %v1218 = vand.u32 %v307, 4294901760
        %v1219 = vsub.f32 %v307, %v1218
        %1220 = vmatmul.mubr.f32.gmra.mrb[0].mxu0 %v1219
        %v1221 = vpop.f32.mrb[0].mxu0
        %v1222 = vadd.f32 %v967, %v1221
        %v1223 = vpop.f32.mrb[0].mxu0
        %v1224 = vand.u32 %v310, 4294901760
        %v1225 = vsub.f32 %v310, %v1224
        %1226 = vmatprep.mubr.f32.mxu0 %v1225
        %v1227 = vand.u32 %v309, 4294901760
        %v1228 = vsub.f32 %v309, %v1227
        %1229 = vmatmul.mubr.f32.gmra.mrb[0].mxu0 %v1228
        %v1230 = vpop.f32.mrb[0].mxu0
        %v1231 = vadd.f32 %v974, %v1230
        %v1232 = vpop.f32.mrb[0].mxu0
        %v1233 = vand.u32 %v312, 4294901760
        %v1234 = vsub.f32 %v312, %v1233
        %1235 = vmatprep.mubr.f32.mxu0 %v1234
        %v1236 = vand.u32 %v311, 4294901760
        %v1237 = vsub.f32 %v311, %v1236
        %1238 = vmatmul.mubr.f32.gmra.mrb[0].mxu0 %v1237
        %v1239 = vpop.f32.mrb[0].mxu0
        %v1240 = vadd.f32 %v981, %v1239
        %v1241 = vpop.f32.mrb[0].mxu0
        %v1242 = vand.u32 %v314, 4294901760
        %v1243 = vsub.f32 %v314, %v1242
        %1244 = vmatprep.mubr.f32.mxu0 %v1243
        %v1245 = vand.u32 %v313, 4294901760
        %v1246 = vsub.f32 %v313, %v1245
        %1247 = vmatmul.mubr.f32.gmra.mrb[0].mxu0 %v1246
        %v1248 = vpop.f32.mrb[0].mxu0
        %v1249 = vadd.f32 %v988, %v1248
        %v1250 = vpop.f32.mrb[0].mxu0
        %v1251 = vand.u32 %v316, 4294901760
        %v1252 = vsub.f32 %v316, %v1251
        %1253 = vmatprep.mubr.f32.mxu0 %v1252
        %v1254 = vand.u32 %v315, 4294901760
        %v1255 = vsub.f32 %v315, %v1254
        %1256 = vmatmul.mubr.f32.gmra.mrb[0].mxu0 %v1255
        %v1257 = vpop.f32.mrb[0].mxu0
        %v1258 = vadd.f32 %v995, %v1257
        %v1259 = vpop.f32.mrb[0].mxu0
        %v1260 = vand.u32 %v318, 4294901760
        %v1261 = vsub.f32 %v318, %v1260
        %1262 = vmatprep.mubr.f32.mxu0 %v1261
        %v1263 = vand.u32 %v317, 4294901760
        %v1264 = vsub.f32 %v317, %v1263
        %1265 = vmatmul.mubr.f32.gmra.mrb[0].mxu0 %v1264
        %v1266 = vpop.f32.mrb[0].mxu0
        %v1267 = vadd.f32 %v1002, %v1266
        %v1268 = vpop.f32.mrb[0].mxu0
        %v1269 = vand.u32 %v320, 4294901760
        %v1270 = vsub.f32 %v320, %v1269
        %1271 = vmatprep.mubr.f32.mxu0 %v1270
        %v1272 = vand.u32 %v319, 4294901760
        %v1273 = vsub.f32 %v319, %v1272
        %1274 = vmatmul.mubr.f32.gmra.mrb[0].mxu0 %v1273
        %v1275 = vpop.f32.mrb[0].mxu0
        %v1276 = vadd.f32 %v1009, %v1275
        %v1277 = vpop.f32.mrb[0].mxu0
        %v1278 = vand.u32 %v322, 4294901760
        %v1279 = vsub.f32 %v322, %v1278
        %1280 = vmatprep.mubr.f32.mxu0 %v1279
        %v1281 = vand.u32 %v321, 4294901760
        %v1282 = vsub.f32 %v321, %v1281
        %1283 = vmatmul.mubr.f32.gmra.mrb[0].mxu0 %v1282
        %v1284 = vpop.f32.mrb[0].mxu0
        %v1285 = vadd.f32 %v1016, %v1284
        %v1286 = vpop.f32.mrb[0].mxu0
        %v1287 = vand.u32 %v324, 4294901760
        %v1288 = vsub.f32 %v324, %v1287
        %1289 = vmatprep.mubr.f32.mxu0 %v1288
        %v1290 = vand.u32 %v323, 4294901760
        %v1291 = vsub.f32 %v323, %v1290
        %1292 = vmatmul.mubr.f32.gmra.mrb[0].mxu0 %v1291
        %v1293 = vpop.f32.mrb[0].mxu0
        %v1294 = vadd.f32 %v1023, %v1293
        %v1295 = vpop.f32.mrb[0].mxu0
        %v1296 = vand.u32 %v326, 4294901760
        %v1297 = vsub.f32 %v326, %v1296
        %1298 = vmatprep.mubr.f32.mxu0 %v1297
        %v1299 = vand.u32 %v325, 4294901760
        %v1300 = vsub.f32 %v325, %v1299
        %1301 = vmatmul.mubr.f32.gmra.mrb[0].mxu0 %v1300
        %v1302 = vpop.f32.mrb[0].mxu0
        %v1303 = vadd.f32 %v1030, %v1302
        %v1304 = vpop.f32.mrb[0].mxu0
        %1305 = vdwg.mxu0
        %1306 = vmatprep.subr.mxu0 0.0
        %v1307 = vand.u32 %v327, 4294901760
        %1308 = vmatpush1.msra.mxu0 %v1307
        %1309 = vmatprep.subr.mxu0 0.0
        %v1310 = vand.u32 %v328, 4294901760
        %1311 = vmatpush1.msra.mxu0 %v1310
        %1312 = vmatprep.subr.mxu0 0.0
        %v1313 = vand.u32 %v329, 4294901760
        %1314 = vmatpush1.msra.mxu0 %v1313
        %1315 = vmatprep.subr.mxu0 0.0
        %v1316 = vand.u32 %v330, 4294901760
        %1317 = vmatpush1.msra.mxu0 %v1316
        %1318 = vmatprep.subr.mxu0 0.0
        %v1319 = vand.u32 %v331, 4294901760
        %1320 = vmatpush1.msra.mxu0 %v1319
        %1321 = vmatprep.subr.mxu0 0.0
        %v1322 = vand.u32 %v332, 4294901760
        %1323 = vmatpush1.msra.mxu0 %v1322
        %1324 = vmatprep.subr.mxu0 0.0
        %v1325 = vand.u32 %v333, 4294901760
        %1326 = vmatpush1.msra.mxu0 %v1325
        %1327 = vmatprep.subr.mxu0 0.0
        %v1328 = vand.u32 %v334, 4294901760
        %1329 = vmatpush1.msra.mxu0 %v1328
        %1330 = vmatprep.subr.mxu0 0.0
        %v1331 = vand.u32 %v335, 4294901760
        %1332 = vmatpush1.msra.mxu0 %v1331
        %1333 = vmatprep.subr.mxu0 0.0
        %v1334 = vand.u32 %v336, 4294901760
        %1335 = vmatpush1.msra.mxu0 %v1334
        %1336 = vmatprep.subr.mxu0 0.0
        %v1337 = vand.u32 %v337, 4294901760
        %1338 = vmatpush1.msra.mxu0 %v1337
        %1339 = vmatprep.subr.mxu0 0.0
        %v1340 = vand.u32 %v338, 4294901760
        %1341 = vmatpush1.msra.mxu0 %v1340
        %1342 = vmatprep.subr.mxu0 0.0
        %v1343 = vand.u32 %v339, 4294901760
        %1344 = vmatpush1.msra.mxu0 %v1343
        %1345 = vmatprep.subr.mxu0 0.0
        %v1346 = vand.u32 %v340, 4294901760
        %1347 = vmatpush1.msra.mxu0 %v1346
        %1348 = vmatprep.subr.mxu0 0.0
        %v1349 = vand.u32 %v341, 4294901760
        %1350 = vmatpush1.msra.mxu0 %v1349
        %1351 = vmatprep.subr.mxu0 0.0
        %v1352 = vand.u32 %v342, 4294901760
        %1353 = vmatpush1.msra.mxu0 %v1352
        %1354 = vmatprep.subr.mxu0 0.0
        %v1355 = vand.u32 %v343, 4294901760
        %1356 = vmatpush1.msra.mxu0 %v1355
        %1357 = vmatprep.subr.mxu0 0.0
        %v1358 = vand.u32 %v344, 4294901760
        %1359 = vmatpush1.msra.mxu0 %v1358
        %1360 = vmatprep.subr.mxu0 0.0
        %v1361 = vand.u32 %v345, 4294901760
        %1362 = vmatpush1.msra.mxu0 %v1361
        %1363 = vmatprep.subr.mxu0 0.0
        %v1364 = vand.u32 %v346, 4294901760
        %1365 = vmatpush1.msra.mxu0 %v1364
        %1366 = vmatprep.subr.mxu0 0.0
        %v1367 = vand.u32 %v347, 4294901760
        %1368 = vmatpush1.msra.mxu0 %v1367
        %1369 = vmatprep.subr.mxu0 0.0
        %v1370 = vand.u32 %v348, 4294901760
        %1371 = vmatpush1.msra.mxu0 %v1370
        %1372 = vmatprep.subr.mxu0 0.0
        %v1373 = vand.u32 %v349, 4294901760
        %1374 = vmatpush1.msra.mxu0 %v1373
        %1375 = vmatprep.subr.mxu0 0.0
        %v1376 = vand.u32 %v350, 4294901760
        %1377 = vmatpush1.msra.mxu0 %v1376
        %1378 = vmatprep.subr.mxu0 0.0
        %v1379 = vand.u32 %v351, 4294901760
        %1380 = vmatpush1.msra.mxu0 %v1379
        %1381 = vmatprep.subr.mxu0 0.0
        %v1382 = vand.u32 %v352, 4294901760
        %1383 = vmatpush1.msra.mxu0 %v1382
        %1384 = vmatprep.subr.mxu0 0.0
        %v1385 = vand.u32 %v353, 4294901760
        %1386 = vmatpush1.msra.mxu0 %v1385
        %1387 = vmatprep.subr.mxu0 0.0
        %v1388 = vand.u32 %v354, 4294901760
        %1389 = vmatpush1.msra.mxu0 %v1388
        %1390 = vmatprep.subr.mxu0 0.0
        %v1391 = vand.u32 %v355, 4294901760
        %1392 = vmatpush1.msra.mxu0 %v1391
        %1393 = vmatprep.subr.mxu0 0.0
        %v1394 = vand.u32 %v356, 4294901760
        %1395 = vmatpush1.msra.mxu0 %v1394
        %1396 = vmatprep.subr.mxu0 0.0
        %v1397 = vand.u32 %v357, 4294901760
        %1398 = vmatpush1.msra.mxu0 %v1397
        %1399 = vmatprep.subr.mxu0 0.0
        %v1400 = vand.u32 %v358, 4294901760
        %1401 = vmatpush1.msra.mxu0 %v1400
        %v1402 = vand.u32 %v296, 4294901760
        %v1403 = vsub.f32 %v296, %v1402
        %v1404 = vand.u32 %v1403, 4294901760
        %1405 = vmatprep.mubr.f32.mxu0 %v1404
        %v1406 = vand.u32 %v295, 4294901760
        %v1407 = vsub.f32 %v295, %v1406
        %v1408 = vand.u32 %v1407, 4294901760
        %1409 = vmatmul.mubr.f32.gmra.mrb[0].mxu0 %v1408
        %v1410 = vpop.f32.mrb[0].mxu0
        %v1411 = vadd.f32 %v1168, %v1410
        %v1412 = vpop.f32.mrb[0].mxu0
        %v1413 = vand.u32 %v298, 4294901760
        %v1414 = vsub.f32 %v298, %v1413
        %v1415 = vand.u32 %v1414, 4294901760
        %1416 = vmatprep.mubr.f32.mxu0 %v1415
        %v1417 = vand.u32 %v297, 4294901760
        %v1418 = vsub.f32 %v297, %v1417
        %v1419 = vand.u32 %v1418, 4294901760
        %1420 = vmatmul.mubr.f32.gmra.mrb[0].mxu0 %v1419
        %v1421 = vpop.f32.mrb[0].mxu0
        %v1422 = vadd.f32 %v1177, %v1421
        %v1423 = vpop.f32.mrb[0].mxu0
        %v1424 = vand.u32 %v300, 4294901760
        %v1425 = vsub.f32 %v300, %v1424
        %v1426 = vand.u32 %v1425, 4294901760
        %1427 = vmatprep.mubr.f32.mxu0 %v1426
        %v1428 = vand.u32 %v299, 4294901760
        %v1429 = vsub.f32 %v299, %v1428
        %v1430 = vand.u32 %v1429, 4294901760
        %1431 = vmatmul.mubr.f32.gmra.mrb[0].mxu0 %v1430
        %v1432 = vpop.f32.mrb[0].mxu0
        %v1433 = vadd.f32 %v1186, %v1432
        %v1434 = vpop.f32.mrb[0].mxu0
        %v1435 = vand.u32 %v302, 4294901760
        %v1436 = vsub.f32 %v302, %v1435
        %v1437 = vand.u32 %v1436, 4294901760
        %1438 = vmatprep.mubr.f32.mxu0 %v1437
        %v1439 = vand.u32 %v301, 4294901760
        %v1440 = vsub.f32 %v301, %v1439
        %v1441 = vand.u32 %v1440, 4294901760
        %1442 = vmatmul.mubr.f32.gmra.mrb[0].mxu0 %v1441
        %v1443 = vpop.f32.mrb[0].mxu0
        %v1444 = vadd.f32 %v1195, %v1443
        %v1445 = vpop.f32.mrb[0].mxu0
        %v1446 = vand.u32 %v304, 4294901760
        %v1447 = vsub.f32 %v304, %v1446
        %v1448 = vand.u32 %v1447, 4294901760
        %1449 = vmatprep.mubr.f32.mxu0 %v1448
        %v1450 = vand.u32 %v303, 4294901760
        %v1451 = vsub.f32 %v303, %v1450
        %v1452 = vand.u32 %v1451, 4294901760
        %1453 = vmatmul.mubr.f32.gmra.mrb[0].mxu0 %v1452
        %v1454 = vpop.f32.mrb[0].mxu0
        %v1455 = vadd.f32 %v1204, %v1454
        %v1456 = vpop.f32.mrb[0].mxu0
        %v1457 = vand.u32 %v306, 4294901760
        %v1458 = vsub.f32 %v306, %v1457
        %v1459 = vand.u32 %v1458, 4294901760
        %1460 = vmatprep.mubr.f32.mxu0 %v1459
        %v1461 = vand.u32 %v305, 4294901760
        %v1462 = vsub.f32 %v305, %v1461
        %v1463 = vand.u32 %v1462, 4294901760
        %1464 = vmatmul.mubr.f32.gmra.mrb[0].mxu0 %v1463
        %v1465 = vpop.f32.mrb[0].mxu0
        %v1466 = vadd.f32 %v1213, %v1465
        %v1467 = vpop.f32.mrb[0].mxu0
        %v1468 = vand.u32 %v308, 4294901760
        %v1469 = vsub.f32 %v308, %v1468
        %v1470 = vand.u32 %v1469, 4294901760
        %1471 = vmatprep.mubr.f32.mxu0 %v1470
        %v1472 = vand.u32 %v307, 4294901760
        %v1473 = vsub.f32 %v307, %v1472
        %v1474 = vand.u32 %v1473, 4294901760
        %1475 = vmatmul.mubr.f32.gmra.mrb[0].mxu0 %v1474
        %v1476 = vpop.f32.mrb[0].mxu0
        %v1477 = vadd.f32 %v1222, %v1476
        %v1478 = vpop.f32.mrb[0].mxu0
        %v1479 = vand.u32 %v310, 4294901760
        %v1480 = vsub.f32 %v310, %v1479
        %v1481 = vand.u32 %v1480, 4294901760
        %1482 = vmatprep.mubr.f32.mxu0 %v1481
        %v1483 = vand.u32 %v309, 4294901760
        %v1484 = vsub.f32 %v309, %v1483
        %v1485 = vand.u32 %v1484, 4294901760
        %1486 = vmatmul.mubr.f32.gmra.mrb[0].mxu0 %v1485
        %v1487 = vpop.f32.mrb[0].mxu0
        %v1488 = vadd.f32 %v1231, %v1487
        %v1489 = vpop.f32.mrb[0].mxu0
        %v1490 = vand.u32 %v312, 4294901760
        %v1491 = vsub.f32 %v312, %v1490
        %v1492 = vand.u32 %v1491, 4294901760
        %1493 = vmatprep.mubr.f32.mxu0 %v1492
        %v1494 = vand.u32 %v311, 4294901760
        %v1495 = vsub.f32 %v311, %v1494
        %v1496 = vand.u32 %v1495, 4294901760
        %1497 = vmatmul.mubr.f32.gmra.mrb[0].mxu0 %v1496
        %v1498 = vpop.f32.mrb[0].mxu0
        %v1499 = vadd.f32 %v1240, %v1498
        %v1500 = vpop.f32.mrb[0].mxu0
        %v1501 = vand.u32 %v314, 4294901760
        %v1502 = vsub.f32 %v314, %v1501
        %v1503 = vand.u32 %v1502, 4294901760
        %1504 = vmatprep.mubr.f32.mxu0 %v1503
        %v1505 = vand.u32 %v313, 4294901760
        %v1506 = vsub.f32 %v313, %v1505
        %v1507 = vand.u32 %v1506, 4294901760
        %1508 = vmatmul.mubr.f32.gmra.mrb[0].mxu0 %v1507
        %v1509 = vpop.f32.mrb[0].mxu0
        %v1510 = vadd.f32 %v1249, %v1509
        %v1511 = vpop.f32.mrb[0].mxu0
        %v1512 = vand.u32 %v316, 4294901760
        %v1513 = vsub.f32 %v316, %v1512
        %v1514 = vand.u32 %v1513, 4294901760
        %1515 = vmatprep.mubr.f32.mxu0 %v1514
        %v1516 = vand.u32 %v315, 4294901760
        %v1517 = vsub.f32 %v315, %v1516
        %v1518 = vand.u32 %v1517, 4294901760
        %1519 = vmatmul.mubr.f32.gmra.mrb[0].mxu0 %v1518
        %v1520 = vpop.f32.mrb[0].mxu0
        %v1521 = vadd.f32 %v1258, %v1520
        %v1522 = vpop.f32.mrb[0].mxu0
        %v1523 = vand.u32 %v318, 4294901760
        %v1524 = vsub.f32 %v318, %v1523
        %v1525 = vand.u32 %v1524, 4294901760
        %1526 = vmatprep.mubr.f32.mxu0 %v1525
        %v1527 = vand.u32 %v317, 4294901760
        %v1528 = vsub.f32 %v317, %v1527
        %v1529 = vand.u32 %v1528, 4294901760
        %1530 = vmatmul.mubr.f32.gmra.mrb[0].mxu0 %v1529
        %v1531 = vpop.f32.mrb[0].mxu0
        %v1532 = vadd.f32 %v1267, %v1531
        %v1533 = vpop.f32.mrb[0].mxu0
        %v1534 = vand.u32 %v320, 4294901760
        %v1535 = vsub.f32 %v320, %v1534
        %v1536 = vand.u32 %v1535, 4294901760
        %1537 = vmatprep.mubr.f32.mxu0 %v1536
        %v1538 = vand.u32 %v319, 4294901760
        %v1539 = vsub.f32 %v319, %v1538
        %v1540 = vand.u32 %v1539, 4294901760
        %1541 = vmatmul.mubr.f32.gmra.mrb[0].mxu0 %v1540
        %v1542 = vpop.f32.mrb[0].mxu0
        %v1543 = vadd.f32 %v1276, %v1542
        %v1544 = vpop.f32.mrb[0].mxu0
        %v1545 = vand.u32 %v322, 4294901760
        %v1546 = vsub.f32 %v322, %v1545
        %v1547 = vand.u32 %v1546, 4294901760
        %1548 = vmatprep.mubr.f32.mxu0 %v1547
        %v1549 = vand.u32 %v321, 4294901760
        %v1550 = vsub.f32 %v321, %v1549
        %v1551 = vand.u32 %v1550, 4294901760
        %1552 = vmatmul.mubr.f32.gmra.mrb[0].mxu0 %v1551
        %v1553 = vpop.f32.mrb[0].mxu0
        %v1554 = vadd.f32 %v1285, %v1553
        %v1555 = vpop.f32.mrb[0].mxu0
        %v1556 = vand.u32 %v324, 4294901760
        %v1557 = vsub.f32 %v324, %v1556
        %v1558 = vand.u32 %v1557, 4294901760
        %1559 = vmatprep.mubr.f32.mxu0 %v1558
        %v1560 = vand.u32 %v323, 4294901760
        %v1561 = vsub.f32 %v323, %v1560
        %v1562 = vand.u32 %v1561, 4294901760
        %1563 = vmatmul.mubr.f32.gmra.mrb[0].mxu0 %v1562
        %v1564 = vpop.f32.mrb[0].mxu0
        %v1565 = vadd.f32 %v1294, %v1564
        %v1566 = vpop.f32.mrb[0].mxu0
        %v1567 = vand.u32 %v326, 4294901760
        %v1568 = vsub.f32 %v326, %v1567
        %v1569 = vand.u32 %v1568, 4294901760
        %1570 = vmatprep.mubr.f32.mxu0 %v1569
        %v1571 = vand.u32 %v325, 4294901760
        %v1572 = vsub.f32 %v325, %v1571
        %v1573 = vand.u32 %v1572, 4294901760
        %1574 = vmatmul.mubr.f32.gmra.mrb[0].mxu0 %v1573
        %v1575 = vpop.f32.mrb[0].mxu0
        %v1576 = vadd.f32 %v1303, %v1575
        %v1577 = vpop.f32.mrb[0].mxu0
        %1578 = vdwg.mxu0
        %1579 = vmatprep.subr.mxu0 0.0
        %v1580 = vand.u32 %v327, 4294901760
        %v1581 = vsub.f32 %v327, %v1580
        %v1582 = vand.u32 %v1581, 4294901760
        %1583 = vmatpush1.msra.mxu0 %v1582
        %1584 = vmatprep.subr.mxu0 0.0
        %v1585 = vand.u32 %v328, 4294901760
        %v1586 = vsub.f32 %v328, %v1585
        %v1587 = vand.u32 %v1586, 4294901760
        %1588 = vmatpush1.msra.mxu0 %v1587
        %1589 = vmatprep.subr.mxu0 0.0
        %v1590 = vand.u32 %v329, 4294901760
        %v1591 = vsub.f32 %v329, %v1590
        %v1592 = vand.u32 %v1591, 4294901760
        %1593 = vmatpush1.msra.mxu0 %v1592
        %1594 = vmatprep.subr.mxu0 0.0
        %v1595 = vand.u32 %v330, 4294901760
        %v1596 = vsub.f32 %v330, %v1595
        %v1597 = vand.u32 %v1596, 4294901760
        %1598 = vmatpush1.msra.mxu0 %v1597
        %1599 = vmatprep.subr.mxu0 0.0
        %v1600 = vand.u32 %v331, 4294901760
        %v1601 = vsub.f32 %v331, %v1600
        %v1602 = vand.u32 %v1601, 4294901760
        %1603 = vmatpush1.msra.mxu0 %v1602
        %1604 = vmatprep.subr.mxu0 0.0
        %v1605 = vand.u32 %v332, 4294901760
        %v1606 = vsub.f32 %v332, %v1605
        %v1607 = vand.u32 %v1606, 4294901760
        %1608 = vmatpush1.msra.mxu0 %v1607
        %1609 = vmatprep.subr.mxu0 0.0
        %v1610 = vand.u32 %v333, 4294901760
        %v1611 = vsub.f32 %v333, %v1610
        %v1612 = vand.u32 %v1611, 4294901760
        %1613 = vmatpush1.msra.mxu0 %v1612
        %1614 = vmatprep.subr.mxu0 0.0
        %v1615 = vand.u32 %v334, 4294901760
        %v1616 = vsub.f32 %v334, %v1615
        %v1617 = vand.u32 %v1616, 4294901760
        %1618 = vmatpush1.msra.mxu0 %v1617
        %1619 = vmatprep.subr.mxu0 0.0
        %v1620 = vand.u32 %v335, 4294901760
        %v1621 = vsub.f32 %v335, %v1620
        %v1622 = vand.u32 %v1621, 4294901760
        %1623 = vmatpush1.msra.mxu0 %v1622
        %1624 = vmatprep.subr.mxu0 0.0
        %v1625 = vand.u32 %v336, 4294901760
        %v1626 = vsub.f32 %v336, %v1625
        %v1627 = vand.u32 %v1626, 4294901760
        %1628 = vmatpush1.msra.mxu0 %v1627
        %1629 = vmatprep.subr.mxu0 0.0
        %v1630 = vand.u32 %v337, 4294901760
        %v1631 = vsub.f32 %v337, %v1630
        %v1632 = vand.u32 %v1631, 4294901760
        %1633 = vmatpush1.msra.mxu0 %v1632
        %1634 = vmatprep.subr.mxu0 0.0
        %v1635 = vand.u32 %v338, 4294901760
        %v1636 = vsub.f32 %v338, %v1635
        %v1637 = vand.u32 %v1636, 4294901760
        %1638 = vmatpush1.msra.mxu0 %v1637
        %1639 = vmatprep.subr.mxu0 0.0
        %v1640 = vand.u32 %v339, 4294901760
        %v1641 = vsub.f32 %v339, %v1640
        %v1642 = vand.u32 %v1641, 4294901760
        %1643 = vmatpush1.msra.mxu0 %v1642
        %1644 = vmatprep.subr.mxu0 0.0
        %v1645 = vand.u32 %v340, 4294901760
        %v1646 = vsub.f32 %v340, %v1645
        %v1647 = vand.u32 %v1646, 4294901760
        %1648 = vmatpush1.msra.mxu0 %v1647
        %1649 = vmatprep.subr.mxu0 0.0
        %v1650 = vand.u32 %v341, 4294901760
        %v1651 = vsub.f32 %v341, %v1650
        %v1652 = vand.u32 %v1651, 4294901760
        %1653 = vmatpush1.msra.mxu0 %v1652
        %1654 = vmatprep.subr.mxu0 0.0
        %v1655 = vand.u32 %v342, 4294901760
        %v1656 = vsub.f32 %v342, %v1655
        %v1657 = vand.u32 %v1656, 4294901760
        %1658 = vmatpush1.msra.mxu0 %v1657
        %1659 = vmatprep.subr.mxu0 0.0
        %v1660 = vand.u32 %v343, 4294901760
        %v1661 = vsub.f32 %v343, %v1660
        %v1662 = vand.u32 %v1661, 4294901760
        %1663 = vmatpush1.msra.mxu0 %v1662
        %1664 = vmatprep.subr.mxu0 0.0
        %v1665 = vand.u32 %v344, 4294901760
        %v1666 = vsub.f32 %v344, %v1665
        %v1667 = vand.u32 %v1666, 4294901760
        %1668 = vmatpush1.msra.mxu0 %v1667
        %1669 = vmatprep.subr.mxu0 0.0
        %v1670 = vand.u32 %v345, 4294901760
        %v1671 = vsub.f32 %v345, %v1670
        %v1672 = vand.u32 %v1671, 4294901760
        %1673 = vmatpush1.msra.mxu0 %v1672
        %1674 = vmatprep.subr.mxu0 0.0
        %v1675 = vand.u32 %v346, 4294901760
        %v1676 = vsub.f32 %v346, %v1675
        %v1677 = vand.u32 %v1676, 4294901760
        %1678 = vmatpush1.msra.mxu0 %v1677
        %1679 = vmatprep.subr.mxu0 0.0
        %v1680 = vand.u32 %v347, 4294901760
        %v1681 = vsub.f32 %v347, %v1680
        %v1682 = vand.u32 %v1681, 4294901760
        %1683 = vmatpush1.msra.mxu0 %v1682
        %1684 = vmatprep.subr.mxu0 0.0
        %v1685 = vand.u32 %v348, 4294901760
        %v1686 = vsub.f32 %v348, %v1685
        %v1687 = vand.u32 %v1686, 4294901760
        %1688 = vmatpush1.msra.mxu0 %v1687
        %1689 = vmatprep.subr.mxu0 0.0
        %v1690 = vand.u32 %v349, 4294901760
        %v1691 = vsub.f32 %v349, %v1690
        %v1692 = vand.u32 %v1691, 4294901760
        %1693 = vmatpush1.msra.mxu0 %v1692
        %1694 = vmatprep.subr.mxu0 0.0
        %v1695 = vand.u32 %v350, 4294901760
        %v1696 = vsub.f32 %v350, %v1695
        %v1697 = vand.u32 %v1696, 4294901760
        %1698 = vmatpush1.msra.mxu0 %v1697
        %1699 = vmatprep.subr.mxu0 0.0
        %v1700 = vand.u32 %v351, 4294901760
        %v1701 = vsub.f32 %v351, %v1700
        %v1702 = vand.u32 %v1701, 4294901760
        %1703 = vmatpush1.msra.mxu0 %v1702
        %1704 = vmatprep.subr.mxu0 0.0
        %v1705 = vand.u32 %v352, 4294901760
        %v1706 = vsub.f32 %v352, %v1705
        %v1707 = vand.u32 %v1706, 4294901760
        %1708 = vmatpush1.msra.mxu0 %v1707
        %1709 = vmatprep.subr.mxu0 0.0
        %v1710 = vand.u32 %v353, 4294901760
        %v1711 = vsub.f32 %v353, %v1710
        %v1712 = vand.u32 %v1711, 4294901760
        %1713 = vmatpush1.msra.mxu0 %v1712
        %1714 = vmatprep.subr.mxu0 0.0
        %v1715 = vand.u32 %v354, 4294901760
        %v1716 = vsub.f32 %v354, %v1715
        %v1717 = vand.u32 %v1716, 4294901760
        %1718 = vmatpush1.msra.mxu0 %v1717
        %1719 = vmatprep.subr.mxu0 0.0
        %v1720 = vand.u32 %v355, 4294901760
        %v1721 = vsub.f32 %v355, %v1720
        %v1722 = vand.u32 %v1721, 4294901760
        %1723 = vmatpush1.msra.mxu0 %v1722
        %1724 = vmatprep.subr.mxu0 0.0
        %v1725 = vand.u32 %v356, 4294901760
        %v1726 = vsub.f32 %v356, %v1725
        %v1727 = vand.u32 %v1726, 4294901760
        %1728 = vmatpush1.msra.mxu0 %v1727
        %1729 = vmatprep.subr.mxu0 0.0
        %v1730 = vand.u32 %v357, 4294901760
        %v1731 = vsub.f32 %v357, %v1730
        %v1732 = vand.u32 %v1731, 4294901760
        %1733 = vmatpush1.msra.mxu0 %v1732
        %1734 = vmatprep.subr.mxu0 0.0
        %v1735 = vand.u32 %v358, 4294901760
        %v1736 = vsub.f32 %v358, %v1735
        %v1737 = vand.u32 %v1736, 4294901760
        %1738 = vmatpush1.msra.mxu0 %v1737
        %v1739 = vand.u32 %v296, 4294901760
        %1740 = vmatprep.mubr.f32.mxu0 %v1739
        %v1741 = vand.u32 %v295, 4294901760
        %1742 = vmatmul.mubr.f32.gmra.mrb[0].mxu0 %v1741
        %v1743 = vpop.f32.mrb[0].mxu0
        %v1744 = vadd.f32 %v1411, %v1743
        %v1745 = vpop.f32.mrb[0].mxu0
        %v1746 = vand.u32 %v298, 4294901760
        %1747 = vmatprep.mubr.f32.mxu0 %v1746
        %v1748 = vand.u32 %v297, 4294901760
        %1749 = vmatmul.mubr.f32.gmra.mrb[0].mxu0 %v1748
        %v1750 = vpop.f32.mrb[0].mxu0
        %v1751 = vadd.f32 %v1422, %v1750
        %v1752 = vpop.f32.mrb[0].mxu0
        %v1753 = vand.u32 %v300, 4294901760
        %1754 = vmatprep.mubr.f32.mxu0 %v1753
        %v1755 = vand.u32 %v299, 4294901760
        %1756 = vmatmul.mubr.f32.gmra.mrb[0].mxu0 %v1755
        %v1757 = vpop.f32.mrb[0].mxu0
        %v1758 = vadd.f32 %v1433, %v1757
        %v1759 = vpop.f32.mrb[0].mxu0
        %v1760 = vand.u32 %v302, 4294901760
        %1761 = vmatprep.mubr.f32.mxu0 %v1760
        %v1762 = vand.u32 %v301, 4294901760
        %1763 = vmatmul.mubr.f32.gmra.mrb[0].mxu0 %v1762
        %v1764 = vpop.f32.mrb[0].mxu0
        %v1765 = vadd.f32 %v1444, %v1764
        %v1766 = vpop.f32.mrb[0].mxu0
        %v1767 = vand.u32 %v304, 4294901760
        %1768 = vmatprep.mubr.f32.mxu0 %v1767
        %v1769 = vand.u32 %v303, 4294901760
        %1770 = vmatmul.mubr.f32.gmra.mrb[0].mxu0 %v1769
        %v1771 = vpop.f32.mrb[0].mxu0
        %v1772 = vadd.f32 %v1455, %v1771
        %v1773 = vpop.f32.mrb[0].mxu0
        %v1774 = vand.u32 %v306, 4294901760
        %1775 = vmatprep.mubr.f32.mxu0 %v1774
        %v1776 = vand.u32 %v305, 4294901760
        %1777 = vmatmul.mubr.f32.gmra.mrb[0].mxu0 %v1776
        %v1778 = vpop.f32.mrb[0].mxu0
        %v1779 = vadd.f32 %v1466, %v1778
        %v1780 = vpop.f32.mrb[0].mxu0
        %v1781 = vand.u32 %v308, 4294901760
        %1782 = vmatprep.mubr.f32.mxu0 %v1781
        %v1783 = vand.u32 %v307, 4294901760
        %1784 = vmatmul.mubr.f32.gmra.mrb[0].mxu0 %v1783
        %v1785 = vpop.f32.mrb[0].mxu0
        %v1786 = vadd.f32 %v1477, %v1785
        %v1787 = vpop.f32.mrb[0].mxu0
        %v1788 = vand.u32 %v310, 4294901760
        %1789 = vmatprep.mubr.f32.mxu0 %v1788
        %v1790 = vand.u32 %v309, 4294901760
        %1791 = vmatmul.mubr.f32.gmra.mrb[0].mxu0 %v1790
        %v1792 = vpop.f32.mrb[0].mxu0
        %v1793 = vadd.f32 %v1488, %v1792
        %v1794 = vpop.f32.mrb[0].mxu0
        %v1795 = vand.u32 %v312, 4294901760
        %1796 = vmatprep.mubr.f32.mxu0 %v1795
        %v1797 = vand.u32 %v311, 4294901760
        %1798 = vmatmul.mubr.f32.gmra.mrb[0].mxu0 %v1797
        %v1799 = vpop.f32.mrb[0].mxu0
        %v1800 = vadd.f32 %v1499, %v1799
        %v1801 = vpop.f32.mrb[0].mxu0
        %v1802 = vand.u32 %v314, 4294901760
        %1803 = vmatprep.mubr.f32.mxu0 %v1802
        %v1804 = vand.u32 %v313, 4294901760
        %1805 = vmatmul.mubr.f32.gmra.mrb[0].mxu0 %v1804
        %v1806 = vpop.f32.mrb[0].mxu0
        %v1807 = vadd.f32 %v1510, %v1806
        %v1808 = vpop.f32.mrb[0].mxu0
        %v1809 = vand.u32 %v316, 4294901760
        %1810 = vmatprep.mubr.f32.mxu0 %v1809
        %v1811 = vand.u32 %v315, 4294901760
        %1812 = vmatmul.mubr.f32.gmra.mrb[0].mxu0 %v1811
        %v1813 = vpop.f32.mrb[0].mxu0
        %v1814 = vadd.f32 %v1521, %v1813
        %v1815 = vpop.f32.mrb[0].mxu0
        %v1816 = vand.u32 %v318, 4294901760
        %1817 = vmatprep.mubr.f32.mxu0 %v1816
        %v1818 = vand.u32 %v317, 4294901760
        %1819 = vmatmul.mubr.f32.gmra.mrb[0].mxu0 %v1818
        %v1820 = vpop.f32.mrb[0].mxu0
        %v1821 = vadd.f32 %v1532, %v1820
        %v1822 = vpop.f32.mrb[0].mxu0
        %v1823 = vand.u32 %v320, 4294901760
        %1824 = vmatprep.mubr.f32.mxu0 %v1823
        %v1825 = vand.u32 %v319, 4294901760
        %1826 = vmatmul.mubr.f32.gmra.mrb[0].mxu0 %v1825
        %v1827 = vpop.f32.mrb[0].mxu0
        %v1828 = vadd.f32 %v1543, %v1827
        %v1829 = vpop.f32.mrb[0].mxu0
        %v1830 = vand.u32 %v322, 4294901760
        %1831 = vmatprep.mubr.f32.mxu0 %v1830
        %v1832 = vand.u32 %v321, 4294901760
        %1833 = vmatmul.mubr.f32.gmra.mrb[0].mxu0 %v1832
        %v1834 = vpop.f32.mrb[0].mxu0
        %v1835 = vadd.f32 %v1554, %v1834
        %v1836 = vpop.f32.mrb[0].mxu0
        %v1837 = vand.u32 %v324, 4294901760
        %1838 = vmatprep.mubr.f32.mxu0 %v1837
        %v1839 = vand.u32 %v323, 4294901760
        %1840 = vmatmul.mubr.f32.gmra.mrb[0].mxu0 %v1839
        %v1841 = vpop.f32.mrb[0].mxu0
        %v1842 = vadd.f32 %v1565, %v1841
        %v1843 = vpop.f32.mrb[0].mxu0
        %v1844 = vand.u32 %v326, 4294901760
        %1845 = vmatprep.mubr.f32.mxu0 %v1844
        %v1846 = vand.u32 %v325, 4294901760
        %1847 = vmatmul.mubr.f32.gmra.mrb[0].mxu0 %v1846
        %v1848 = vpop.f32.mrb[0].mxu0
        %v1849 = vadd.f32 %v1576, %v1848
        %v1850 = vpop.f32.mrb[0].mxu0
        %1851 = vdwg.mxu0
        %1852 = vmatprep.subr.mxu0 0.0
        %v1853 = vand.u32 %v327, 4294901760
        %1854 = vmatpush1.msra.mxu0 %v1853
        %1855 = vmatprep.subr.mxu0 0.0
        %v1856 = vand.u32 %v328, 4294901760
        %1857 = vmatpush1.msra.mxu0 %v1856
        %1858 = vmatprep.subr.mxu0 0.0
        %v1859 = vand.u32 %v329, 4294901760
        %1860 = vmatpush1.msra.mxu0 %v1859
        %1861 = vmatprep.subr.mxu0 0.0
        %v1862 = vand.u32 %v330, 4294901760
        %1863 = vmatpush1.msra.mxu0 %v1862
        %1864 = vmatprep.subr.mxu0 0.0
        %v1865 = vand.u32 %v331, 4294901760
        %1866 = vmatpush1.msra.mxu0 %v1865
        %1867 = vmatprep.subr.mxu0 0.0
        %v1868 = vand.u32 %v332, 4294901760
        %1869 = vmatpush1.msra.mxu0 %v1868
        %1870 = vmatprep.subr.mxu0 0.0
        %v1871 = vand.u32 %v333, 4294901760
        %1872 = vmatpush1.msra.mxu0 %v1871
        %1873 = vmatprep.subr.mxu0 0.0
        %v1874 = vand.u32 %v334, 4294901760
        %1875 = vmatpush1.msra.mxu0 %v1874
        %1876 = vmatprep.subr.mxu0 0.0
        %v1877 = vand.u32 %v335, 4294901760
        %1878 = vmatpush1.msra.mxu0 %v1877
        %1879 = vmatprep.subr.mxu0 0.0
        %v1880 = vand.u32 %v336, 4294901760
        %1881 = vmatpush1.msra.mxu0 %v1880
        %1882 = vmatprep.subr.mxu0 0.0
        %v1883 = vand.u32 %v337, 4294901760
        %1884 = vmatpush1.msra.mxu0 %v1883
        %1885 = vmatprep.subr.mxu0 0.0
        %v1886 = vand.u32 %v338, 4294901760
        %1887 = vmatpush1.msra.mxu0 %v1886
        %1888 = vmatprep.subr.mxu0 0.0
        %v1889 = vand.u32 %v339, 4294901760
        %1890 = vmatpush1.msra.mxu0 %v1889
        %1891 = vmatprep.subr.mxu0 0.0
        %v1892 = vand.u32 %v340, 4294901760
        %1893 = vmatpush1.msra.mxu0 %v1892
        %1894 = vmatprep.subr.mxu0 0.0
        %v1895 = vand.u32 %v341, 4294901760
        %1896 = vmatpush1.msra.mxu0 %v1895
        %1897 = vmatprep.subr.mxu0 0.0
        %v1898 = vand.u32 %v342, 4294901760
        %1899 = vmatpush1.msra.mxu0 %v1898
        %1900 = vmatprep.subr.mxu0 0.0
        %v1901 = vand.u32 %v343, 4294901760
        %1902 = vmatpush1.msra.mxu0 %v1901
        %1903 = vmatprep.subr.mxu0 0.0
        %v1904 = vand.u32 %v344, 4294901760
        %1905 = vmatpush1.msra.mxu0 %v1904
        %1906 = vmatprep.subr.mxu0 0.0
        %v1907 = vand.u32 %v345, 4294901760
        %1908 = vmatpush1.msra.mxu0 %v1907
        %1909 = vmatprep.subr.mxu0 0.0
        %v1910 = vand.u32 %v346, 4294901760
        %1911 = vmatpush1.msra.mxu0 %v1910
        %1912 = vmatprep.subr.mxu0 0.0
        %v1913 = vand.u32 %v347, 4294901760
        %1914 = vmatpush1.msra.mxu0 %v1913
        %1915 = vmatprep.subr.mxu0 0.0
        %v1916 = vand.u32 %v348, 4294901760
        %1917 = vmatpush1.msra.mxu0 %v1916
        %1918 = vmatprep.subr.mxu0 0.0
        %v1919 = vand.u32 %v349, 4294901760
        %1920 = vmatpush1.msra.mxu0 %v1919
        %1921 = vmatprep.subr.mxu0 0.0
        %v1922 = vand.u32 %v350, 4294901760
        %1923 = vmatpush1.msra.mxu0 %v1922
        %1924 = vmatprep.subr.mxu0 0.0
        %v1925 = vand.u32 %v351, 4294901760
        %1926 = vmatpush1.msra.mxu0 %v1925
        %1927 = vmatprep.subr.mxu0 0.0
        %v1928 = vand.u32 %v352, 4294901760
        %1929 = vmatpush1.msra.mxu0 %v1928
        %1930 = vmatprep.subr.mxu0 0.0
        %v1931 = vand.u32 %v353, 4294901760
        %1932 = vmatpush1.msra.mxu0 %v1931
        %1933 = vmatprep.subr.mxu0 0.0
        %v1934 = vand.u32 %v354, 4294901760
        %1935 = vmatpush1.msra.mxu0 %v1934
        %1936 = vmatprep.subr.mxu0 0.0
        %v1937 = vand.u32 %v355, 4294901760
        %1938 = vmatpush1.msra.mxu0 %v1937
        %1939 = vmatprep.subr.mxu0 0.0
        %v1940 = vand.u32 %v356, 4294901760
        %1941 = vmatpush1.msra.mxu0 %v1940
        %1942 = vmatprep.subr.mxu0 0.0
        %v1943 = vand.u32 %v357, 4294901760
        %1944 = vmatpush1.msra.mxu0 %v1943
        %1945 = vmatprep.subr.mxu0 0.0
        %v1946 = vand.u32 %v358, 4294901760
        %1947 = vmatpush1.msra.mxu0 %v1946
        %v1948 = vand.u32 %v296, 4294901760
        %1949 = vmatprep.mubr.f32.mxu0 %v1948
        %v1950 = vand.u32 %v295, 4294901760
        %1951 = vmatmul.mubr.f32.gmra.mrb[0].mxu0 %v1950
        %v1952 = vpop.f32.mrb[0].mxu0
        %v1953 = vadd.f32 %v1744, %v1952
        %v1954 = vpop.f32.mrb[0].mxu0
        %v1955 = vand.u32 %v298, 4294901760
        %1956 = vmatprep.mubr.f32.mxu0 %v1955
        %v1957 = vand.u32 %v297, 4294901760
        %1958 = vmatmul.mubr.f32.gmra.mrb[0].mxu0 %v1957
        %v1959 = vpop.f32.mrb[0].mxu0
        %v1960 = vadd.f32 %v1751, %v1959
        %v1961 = vpop.f32.mrb[0].mxu0
        %v1962 = vand.u32 %v300, 4294901760
        %1963 = vmatprep.mubr.f32.mxu0 %v1962
        %v1964 = vand.u32 %v299, 4294901760
        %1965 = vmatmul.mubr.f32.gmra.mrb[0].mxu0 %v1964
        %v1966 = vpop.f32.mrb[0].mxu0
        %v1967 = vadd.f32 %v1758, %v1966
        %v1968 = vpop.f32.mrb[0].mxu0
        %v1969 = vand.u32 %v302, 4294901760
        %1970 = vmatprep.mubr.f32.mxu0 %v1969
        %v1971 = vand.u32 %v301, 4294901760
        %1972 = vmatmul.mubr.f32.gmra.mrb[0].mxu0 %v1971
        %v1973 = vpop.f32.mrb[0].mxu0
        %v1974 = vadd.f32 %v1765, %v1973
        %v1975 = vpop.f32.mrb[0].mxu0
        %v1976 = vand.u32 %v304, 4294901760
        %1977 = vmatprep.mubr.f32.mxu0 %v1976
        %v1978 = vand.u32 %v303, 4294901760
        %1979 = vmatmul.mubr.f32.gmra.mrb[0].mxu0 %v1978
        %v1980 = vpop.f32.mrb[0].mxu0
        %v1981 = vadd.f32 %v1772, %v1980
        %v1982 = vpop.f32.mrb[0].mxu0
        %v1983 = vand.u32 %v306, 4294901760
        %1984 = vmatprep.mubr.f32.mxu0 %v1983
        %v1985 = vand.u32 %v305, 4294901760
        %1986 = vmatmul.mubr.f32.gmra.mrb[0].mxu0 %v1985
        %v1987 = vpop.f32.mrb[0].mxu0
        %v1988 = vadd.f32 %v1779, %v1987
        %v1989 = vpop.f32.mrb[0].mxu0
        %v1990 = vand.u32 %v308, 4294901760
        %1991 = vmatprep.mubr.f32.mxu0 %v1990
        %v1992 = vand.u32 %v307, 4294901760
        %1993 = vmatmul.mubr.f32.gmra.mrb[0].mxu0 %v1992
        %v1994 = vpop.f32.mrb[0].mxu0
        %v1995 = vadd.f32 %v1786, %v1994
        %v1996 = vpop.f32.mrb[0].mxu0
        %v1997 = vand.u32 %v310, 4294901760
        %1998 = vmatprep.mubr.f32.mxu0 %v1997
        %v1999 = vand.u32 %v309, 4294901760
        %2000 = vmatmul.mubr.f32.gmra.mrb[0].mxu0 %v1999
        %v2001 = vpop.f32.mrb[0].mxu0
        %v2002 = vadd.f32 %v1793, %v2001
        %v2003 = vpop.f32.mrb[0].mxu0
        %v2004 = vand.u32 %v312, 4294901760
        %2005 = vmatprep.mubr.f32.mxu0 %v2004
        %v2006 = vand.u32 %v311, 4294901760
        %2007 = vmatmul.mubr.f32.gmra.mrb[0].mxu0 %v2006
        %v2008 = vpop.f32.mrb[0].mxu0
        %v2009 = vadd.f32 %v1800, %v2008
        %v2010 = vpop.f32.mrb[0].mxu0
        %v2011 = vand.u32 %v314, 4294901760
        %2012 = vmatprep.mubr.f32.mxu0 %v2011
        %v2013 = vand.u32 %v313, 4294901760
        %2014 = vmatmul.mubr.f32.gmra.mrb[0].mxu0 %v2013
        %v2015 = vpop.f32.mrb[0].mxu0
        %v2016 = vadd.f32 %v1807, %v2015
        %v2017 = vpop.f32.mrb[0].mxu0
        %v2018 = vand.u32 %v316, 4294901760
        %2019 = vmatprep.mubr.f32.mxu0 %v2018
        %v2020 = vand.u32 %v315, 4294901760
        %2021 = vmatmul.mubr.f32.gmra.mrb[0].mxu0 %v2020
        %v2022 = vpop.f32.mrb[0].mxu0
        %v2023 = vadd.f32 %v1814, %v2022
        %v2024 = vpop.f32.mrb[0].mxu0
        %v2025 = vand.u32 %v318, 4294901760
        %2026 = vmatprep.mubr.f32.mxu0 %v2025
        %v2027 = vand.u32 %v317, 4294901760
        %2028 = vmatmul.mubr.f32.gmra.mrb[0].mxu0 %v2027
        %v2029 = vpop.f32.mrb[0].mxu0
        %v2030 = vadd.f32 %v1821, %v2029
        %v2031 = vpop.f32.mrb[0].mxu0
        %v2032 = vand.u32 %v320, 4294901760
        %2033 = vmatprep.mubr.f32.mxu0 %v2032
        %v2034 = vand.u32 %v319, 4294901760
        %2035 = vmatmul.mubr.f32.gmra.mrb[0].mxu0 %v2034
        %v2036 = vpop.f32.mrb[0].mxu0
        %v2037 = vadd.f32 %v1828, %v2036
        %v2038 = vpop.f32.mrb[0].mxu0
        %v2039 = vand.u32 %v322, 4294901760
        %2040 = vmatprep.mubr.f32.mxu0 %v2039
        %v2041 = vand.u32 %v321, 4294901760
        %2042 = vmatmul.mubr.f32.gmra.mrb[0].mxu0 %v2041
        %v2043 = vpop.f32.mrb[0].mxu0
        %v2044 = vadd.f32 %v1835, %v2043
        %v2045 = vpop.f32.mrb[0].mxu0
        %v2046 = vand.u32 %v324, 4294901760
        %2047 = vmatprep.mubr.f32.mxu0 %v2046
        %v2048 = vand.u32 %v323, 4294901760
        %2049 = vmatmul.mubr.f32.gmra.mrb[0].mxu0 %v2048
        %v2050 = vpop.f32.mrb[0].mxu0
        %v2051 = vadd.f32 %v1842, %v2050
        %v2052 = vpop.f32.mrb[0].mxu0
        %v2053 = vand.u32 %v326, 4294901760
        %2054 = vmatprep.mubr.f32.mxu0 %v2053
        %v2055 = vand.u32 %v325, 4294901760
        %2056 = vmatmul.mubr.f32.gmra.mrb[0].mxu0 %v2055
        %v2057 = vpop.f32.mrb[0].mxu0
        %v2058 = vadd.f32 %v1849, %v2057
        %v2059 = vpop.f32.mrb[0].mxu0
        %2060 = vdwg.mxu0
        %v2061 = vadd.f32 %v279, %v1953
        %v2062 = vadd.f32 %v280, %v1960
        %v2063 = vadd.f32 %v281, %v1967
        %v2064 = vadd.f32 %v282, %v1974
        %v2065 = vadd.f32 %v283, %v1981
        %v2066 = vadd.f32 %v284, %v1988
        %v2067 = vadd.f32 %v285, %v1995
        %v2068 = vadd.f32 %v286, %v2002
        %v2069 = vadd.f32 %v287, %v2009
        %v2070 = vadd.f32 %v288, %v2016
        %v2071 = vadd.f32 %v289, %v2023
        %v2072 = vadd.f32 %v290, %v2030
        %v2073 = vadd.f32 %v291, %v2037
        %v2074 = vadd.f32 %v292, %v2044
        %v2075 = vadd.f32 %v293, %v2051
        %v2076 = vadd.f32 %v294, %v2058
        %2077 = vst [vmem:[%s251] sm:$0xff] %v2061
        %2078 = vst [vmem:[%s251 + $0x8] sm:$0xff] %v2062
        %2079 = vst [vmem:[%s251 + $0x10] sm:$0xff] %v2063
        %2080 = vst [vmem:[%s251 + $0x18] sm:$0xff] %v2064
        %2081 = vst [vmem:[%s251 + $0x20] sm:$0xff] %v2065
        %2082 = vst [vmem:[%s251 + $0x28] sm:$0xff] %v2066
        %2083 = vst [vmem:[%s251 + $0x30] sm:$0xff] %v2067
        %2084 = vst [vmem:[%s251 + $0x38] sm:$0xff] %v2068
        %2085 = vst [vmem:[%s251 + $0x40] sm:$0xff] %v2069
        %2086 = vst [vmem:[%s251 + $0x48] sm:$0xff] %v2070
        %2087 = vst [vmem:[%s251 + $0x50] sm:$0xff] %v2071
        %2088 = vst [vmem:[%s251 + $0x58] sm:$0xff] %v2072
        %2089 = vst [vmem:[%s251 + $0x60] sm:$0xff] %v2073
        %2090 = vst [vmem:[%s251 + $0x68] sm:$0xff] %v2074
        %2091 = vst [vmem:[%s251 + $0x70] sm:$0xff] %v2075
        %2092 = vst [vmem:[%s251 + $0x78] sm:$0xff] %v2076
        // Predicated region
        $region45: #{tpu_custom_call.1} parent=31 // pred_check
          %p2093 = pneg %p259
        $region46: #{tpu_custom_call.1} parent=31 // pred_check_branch
          %2095 = sbr.rel (%p2093) target = $region48
        $region47: #{tpu_custom_call.1} parent=31 // pred_region
          %v2096 = vld [vmem:[%s251] sm:$0xff]
          %v2097 = vld [vmem:[%s251 + $0x8] sm:$0xff]
          %v2098 = vld [vmem:[%s251 + $0x10] sm:$0xff]
          %v2099 = vld [vmem:[%s251 + $0x18] sm:$0xff]
          %v2100 = vld [vmem:[%s251 + $0x20] sm:$0xff]
          %v2101 = vld [vmem:[%s251 + $0x28] sm:$0xff]
          %v2102 = vld [vmem:[%s251 + $0x30] sm:$0xff]
          %v2103 = vld [vmem:[%s251 + $0x38] sm:$0xff]
          %v2104 = vld [vmem:[%s251 + $0x40] sm:$0xff]
          %v2105 = vld [vmem:[%s251 + $0x48] sm:$0xff]
          %v2106 = vld [vmem:[%s251 + $0x50] sm:$0xff]
          %v2107 = vld [vmem:[%s251 + $0x58] sm:$0xff]
          %v2108 = vld [vmem:[%s251 + $0x60] sm:$0xff]
          %v2109 = vld [vmem:[%s251 + $0x68] sm:$0xff]
          %v2110 = vld [vmem:[%s251 + $0x70] sm:$0xff]
          %v2111 = vld [vmem:[%s251 + $0x78] sm:$0xff]
          %v2112 = vld [vmem:[%s257] sm:$0x1]
          %v2114 = vlaneseq
          %v2115 = vshrl.u32 %v2114, 7
          %v2116 = vsub.s32 0, %v2115
          %v2117 = vrot.slane %v2112, %v2116
          %v2119 = vadd.f32 %v2096, %v2117
          %v2120 = vadd.f32 %v2097, %v2117
          %v2121 = vadd.f32 %v2098, %v2117
          %v2122 = vadd.f32 %v2099, %v2117
          %v2123 = vadd.f32 %v2100, %v2117
          %v2124 = vadd.f32 %v2101, %v2117
          %v2125 = vadd.f32 %v2102, %v2117
          %v2126 = vadd.f32 %v2103, %v2117
          %v2127 = vadd.f32 %v2104, %v2117
          %v2128 = vadd.f32 %v2105, %v2117
          %v2129 = vadd.f32 %v2106, %v2117
          %v2130 = vadd.f32 %v2107, %v2117
          %v2131 = vadd.f32 %v2108, %v2117
          %v2132 = vadd.f32 %v2109, %v2117
          %v2133 = vadd.f32 %v2110, %v2117
          %v2134 = vadd.f32 %v2111, %v2117
          %2135 = vst [vmem:[%s251] sm:$0xff] %v2119
          %2136 = vst [vmem:[%s251 + $0x8] sm:$0xff] %v2120
          %2137 = vst [vmem:[%s251 + $0x10] sm:$0xff] %v2121
          %2138 = vst [vmem:[%s251 + $0x18] sm:$0xff] %v2122
          %2139 = vst [vmem:[%s251 + $0x20] sm:$0xff] %v2123
          %2140 = vst [vmem:[%s251 + $0x28] sm:$0xff] %v2124
          %2141 = vst [vmem:[%s251 + $0x30] sm:$0xff] %v2125
          %2142 = vst [vmem:[%s251 + $0x38] sm:$0xff] %v2126
          %2143 = vst [vmem:[%s251 + $0x40] sm:$0xff] %v2127
          %2144 = vst [vmem:[%s251 + $0x48] sm:$0xff] %v2128
          %2145 = vst [vmem:[%s251 + $0x50] sm:$0xff] %v2129
          %2146 = vst [vmem:[%s251 + $0x58] sm:$0xff] %v2130
          %2147 = vst [vmem:[%s251 + $0x60] sm:$0xff] %v2131
          %2148 = vst [vmem:[%s251 + $0x68] sm:$0xff] %v2132
          %2149 = vst [vmem:[%s251 + $0x70] sm:$0xff] %v2133
          %2150 = vst [vmem:[%s251 + $0x78] sm:$0xff] %v2134
        $region48: #{tpu_custom_call.1} parent=31 // pred_fallthru
          _
        %s2151 = sand.u32 %s132, 1
        %s2152 = scalar_lea.sflag [#allocation4], %s2151
        %s2153 = sand.u32 %s132, 1
        %s2154 = smul.addr %s2153, 128
        %s2155 = scalar_lea.vmem [#allocation7], %s2154
        // Predicated region
        $region49: #{tpu_custom_call.1} parent=31 // pred_check
          %p2156 = pneg %p142
        $region50: #{tpu_custom_call.1} parent=31 // pred_check_branch
          %2158 = sbr.rel (%p2156) target = $region52
        $region51: #{tpu_custom_call.1} parent=31 // pred_region
          %s2159 = smul.u32 16, %s26
          %s2161 = ssub.s32 2048, 2048
          %2162 = vsyncadd %s2152, %s2161
          %s2163 = sadd.s32 %s27, %s2159
          %s2164 = smul.addr %s2163, 128
          %s2165 = scalar_lea.hbm %s3, %s2164
          %s2166 = sshll.u32 %s2155, 4
          %s2167 = int_to_ptr.vmem [resolvable:$true] %s2166
          %2172 = dma.vmem_to_hbm [thread:$0]  %s2167, 2048, %s2165, %s2152, 128, 128, 8
        $region52: #{tpu_custom_call.1} parent=31 // pred_fallthru
          _
      $region32: #{tpu_custom_call.1} parent=5 // pred_fallthru
        _
      %p2173 = scmp.le.s32.totalorder 2, %s16
      // Predicated region
      $region53: #{tpu_custom_call.1} parent=5 // pred_check
        %p2174 = pneg %p2173
      $region54: #{tpu_custom_call.1} parent=5 // pred_check_branch
        %2176 = sbr.rel (%p2174) target = $region56
      $region55: #{tpu_custom_call.1} parent=5 // pred_region
        %s2177 = ssub.s32 %s16, 2
        // Predicated region
        $region57: #{tpu_custom_call.1} parent=55 // pred_check
          %p2178 = pneg %p148
        $region58: #{tpu_custom_call.1} parent=55 // pred_check_branch
          %2180 = sbr.rel (%p2178) target = $region60
        $region59: #{tpu_custom_call.1} parent=55 // pred_region
          %s2181 = sand.u32 %s133, 1
          %s2182 = scalar_lea.sflag [#allocation4], %s2181
          %s2183 = sand.u32 %s133, 1
          %s2184 = smul.addr %s2183, 128
          %s2185 = scalar_lea.vmem [#allocation7], %s2184
          %2186 = dma.done %s2182, 2048
        $region60: #{tpu_custom_call.1} parent=55 // pred_fallthru
          _
      $region56: #{tpu_custom_call.1} parent=5 // pred_fallthru
        _
    $region6: #{tpu_custom_call.1} parent=1 // loop_footer
      %s20 = sadd.s32 1, %s16
    $region7: #{tpu_custom_call.1} parent=1 // loop_footer_branch
      %15 = sbr.rel target = $region3
    $region8: #{tpu_custom_call.1} parent=1 // loop_exit
      _
    %2187 = vsyncpa [#allocation3], 1
    %s2188 = scalar_lea.sflag [#allocation3], 1
    %2189 = vsyncpa %s2188, 1
    %2190 = vsyncpa [#allocation6], 1
    %2191 = vsyncpa [#allocation4], 1
    %s2192 = scalar_lea.sflag [#allocation4], 1
    %2193 = vsyncpa %s2192, 1

</llo_original>
